<compile_context>
chip_gen: v7x
topology: tpu7x:2x2x1
jax: 0.10.0
libtpu: 0.0.40
codegen_flags: <defaults>
</compile_context>

<pallas_src>
import functools

import jax
import jax.numpy as jnp
from jax.experimental import pallas as pl
from jax.experimental.pallas import tpu as pltpu


def _round_up(x, m):
    return (x + m - 1) // m * m


def _choose_tile_m(M, max_tm=512):
    """Largest multiple-of-8 row tile <= max_tm that minimizes padding of M."""
    best_tm, best_mpad = 8, _round_up(M, 8)
    for tm in range(8, max_tm + 1, 8):
        mpad = _round_up(M, tm)
        if mpad <= best_mpad:          # '<=' prefers the larger tile on ties
            best_tm, best_mpad = tm, mpad
    return best_tm, best_mpad


# ----------------------------------------------------------------------------
# Kernel 1: per-M-tile partial (sum, sum of squares) per channel.
# grid = (M tiles,), fully parallel; partials reduced with a tiny jnp.sum.
# ----------------------------------------------------------------------------
def _stats_kernel(x_ref, o_ref):
    x = x_ref[...].astype(jnp.float32)
    o_ref[...] = jnp.stack([jnp.sum(x, axis=0), jnp.sum(x * x, axis=0)])


def channel_stats(x, *, tm):
    Mp, C = x.shape
    G = Mp // tm
    part = pl.pallas_call(
        _stats_kernel,
        out_shape=jax.ShapeDtypeStruct((G, 2, C), jnp.float32),
        grid_spec=pltpu.PrefetchScalarGridSpec(
            num_scalar_prefetch=0,
            grid=(G,),
            in_specs=[pl.BlockSpec((tm, C), lambda i: (i, 0))],
            out_specs=pl.BlockSpec((None, 2, C), lambda i: (i, 0, 0)),
        ),
        compiler_params=pltpu.CompilerParams(
            dimension_semantics=("parallel",)),
    )(x)
    return jnp.sum(part, axis=0)                       # (2, C)


# ----------------------------------------------------------------------------
# Kernel 2: fused BN1-affine + add + ReLU + 1x1 conv (full-Cin matmul), also
# emitting per-tile partial sum/sumsq of z for BN2.
#   z[m, :] = sum_k relu(x1[m,k]*scale1[k] + bias1[k] + x2[m,k]) * w[k, :]
# grid = (M tiles,) only -> the (Cin, Cout) weight block stays resident.
# ----------------------------------------------------------------------------
def _fused_kernel(x1_ref, x2_ref, s_ref, b_ref, w_ref, o_ref, zstat_ref,
                  *, tm, m_valid, mm_dtype):
    # elementwise math kept in f32 (v5e has no bf16 VALU)
    x = (x1_ref[...].astype(jnp.float32) * s_ref[...] + b_ref[...]
         + x2_ref[...].astype(jnp.float32))
    y = jnp.maximum(x, 0.0)

    if m_valid is not None:  # static: zero rows past the true M (padding)
        row = (pl.program_id(0) * tm
               + jax.lax.broadcasted_iota(jnp.int32, (tm, 1), 0))
        y = jnp.where(row < m_valid, y, 0.0)

    # MXU matmul; operands optionally bf16 (v6e/v7x), accumulation in f32.
    z = jnp.dot(y.astype(mm_dtype), w_ref[...],
                preferred_element_type=jnp.float32)
    o_ref[...] = z
    zstat_ref[...] = jnp.stack([jnp.sum(z, axis=0), jnp.sum(z * z, axis=0)])


def fused_bn_add_relu_conv(x1, x2, scale1, bias1, w, *, tm, m_valid, mm_dtype):
    Mp, Cin = x1.shape
    Cout = w.shape[1]
    G = Mp // tm
    kern = functools.partial(
        _fused_kernel, tm=tm,
        m_valid=(None if m_valid == Mp else m_valid),
        mm_dtype=mm_dtype)
    z, zstat = pl.pallas_call(
        kern,
        out_shape=(jax.ShapeDtypeStruct((Mp, Cout), jnp.float32),
                   jax.ShapeDtypeStruct((G, 2, Cout), jnp.float32)),
        grid_spec=pltpu.PrefetchScalarGridSpec(
            num_scalar_prefetch=0,
            grid=(G,),
            in_specs=[
                pl.BlockSpec((tm, Cin), lambda i: (i, 0)),     # x1
                pl.BlockSpec((tm, Cin), lambda i: (i, 0)),     # x2 (residual)
                pl.BlockSpec((1, Cin), lambda i: (0, 0)),      # scale1
                pl.BlockSpec((1, Cin), lambda i: (0, 0)),      # bias1
                pl.BlockSpec((Cin, Cout), lambda i: (0, 0)),   # conv weight
            ],
            out_specs=(
                pl.BlockSpec((tm, Cout), lambda i: (i, 0)),          # z
                pl.BlockSpec((None, 2, Cout), lambda i: (i, 0, 0)),  # z stats
            ),
        ),
        compiler_params=pltpu.CompilerParams(
            dimension_semantics=("parallel",)),
    )(x1, x2, scale1.reshape(1, Cin), bias1.reshape(1, Cin),
      w.astype(mm_dtype))
    return z, jnp.sum(zstat, axis=0)                   # (Mp, Cout), (2, Cout)


# ----------------------------------------------------------------------------
# Kernel 3: BN2 applied as a per-channel affine  z*scale2 + bias2.
# ----------------------------------------------------------------------------
def _affine_kernel(z_ref, s_ref, b_ref, o_ref):
    o_ref[...] = (z_ref[...] * s_ref[...] + b_ref[...]).astype(o_ref.dtype)


def affine_apply(z, scale, bias, *, tm, out_dtype):
    Mp, C = z.shape
    G = Mp // tm
    return pl.pallas_call(
        _affine_kernel,
        out_shape=jax.ShapeDtypeStruct((Mp, C), out_dtype),
        grid_spec=pltpu.PrefetchScalarGridSpec(
            num_scalar_prefetch=0,
            grid=(G,),
            in_specs=[
                pl.BlockSpec((tm, C), lambda i: (i, 0)),
                pl.BlockSpec((1, C), lambda i: (0, 0)),
                pl.BlockSpec((1, C), lambda i: (0, 0)),
            ],
            out_specs=pl.BlockSpec((tm, C), lambda i: (i, 0)),
        ),
        compiler_params=pltpu.CompilerParams(
            dimension_semantics=("parallel",)),
    )(z, scale.reshape(1, C), bias.reshape(1, C))


# ----------------------------------------------------------------------------
# Full forward pass.  NCHW at the boundary (PyTorch layout); channels moved to
# the lane axis for the kernels.
# ----------------------------------------------------------------------------
@functools.partial(jax.jit, static_argnames=("eps", "matmul_dtype"))
def forward(x179, x172, gamma1, beta1, conv_w, gamma2, beta2,
            eps=1e-5, matmul_dtype=jnp.bfloat16):
    N, Cin, H, W = x179.shape
    Cout = conv_w.shape[0]
    M = N * H * W
    tm, Mp = _choose_tile_m(M)

    a = jnp.transpose(x179, (0, 2, 3, 1)).reshape(M, Cin)   # NCHW -> (M, Cin)
    r = jnp.transpose(x172, (0, 2, 3, 1)).reshape(M, Cin)
    if Mp != M:
        pad = ((0, Mp - M), (0, 0))
        a = jnp.pad(a, pad)    # zero rows: contribute nothing to BN1 sums
        r = jnp.pad(r, pad)
    w2d = conv_w.reshape(Cout, Cin).T                        # (Cin, Cout)

    # --- BN1 batch statistics (training-mode forward; biased variance) ---
    st1 = channel_stats(a, tm=tm)
    mean1 = st1[0] / M
    var1 = st1[1] / M - mean1 * mean1
    scale1 = gamma1 * jax.lax.rsqrt(var1 + eps)
    bias1 = beta1 - mean1 * scale1
    # TODO(synk): running_mean/running_var momentum updates of the two
    # BatchNorm2d modules (training side-effect) are not materialized.

    # --- fused BN1-affine + add + ReLU + 1x1 conv (+ z partial stats) ---
    z, st2 = fused_bn_add_relu_conv(a, r, scale1, bias1, w2d,
                                    tm=tm, m_valid=M, mm_dtype=matmul_dtype)
    mean2 = st2[0] / M
    var2 = st2[1] / M - mean2 * mean2
    scale2 = gamma2 * jax.lax.rsqrt(var2 + eps)
    bias2 = beta2 - mean2 * scale2

    y = affine_apply(z, scale2, bias2, tm=tm, out_dtype=x179.dtype)
    y = y[:M].reshape(N, H, W, Cout).transpose(0, 3, 1, 2)   # back to NCHW
    return y


# Pure-JAX reference for verification.
def reference(x179, x172, gamma1, beta1, conv_w, gamma2, beta2, eps=1e-5):
    def bn(x, g, b):
        m = x.mean(axis=(0, 2, 3), keepdims=True)
        v = x.var(axis=(0, 2, 3), keepdims=True)   # biased, like PyTorch train BN
        return ((x - m) / jnp.sqrt(v + eps)) * g.reshape(1, -1, 1, 1) \
            + b.reshape(1, -1, 1, 1)

    t = jnp.maximum(bn(x179, gamma1, beta1) + x172, 0.0)
    z = jnp.einsum("nchw,oc->nohw", t, conv_w.reshape(conv_w.shape[0], -1))
    return bn(z, gamma2, beta2)


if __name__ == "__main__":
    eps = 1e-5

    def make_inputs(key, N, Cin, H, W, Cout):
        k = jax.random.split(key, 7)
        x179 = jax.random.normal(k[0], (N, Cin, H, W), jnp.float32)
        x172 = jax.random.normal(k[1], (N, Cin, H, W), jnp.float32)
        gamma1 = 1.0 + 0.1 * jax.random.normal(k[2], (Cin,), jnp.float32)
        beta1 = 0.1 * jax.random.normal(k[3], (Cin,), jnp.float32)
        conv_w = 0.05 * jax.random.normal(k[4], (Cout, Cin, 1, 1), jnp.float32)
        gamma2 = 1.0 + 0.1 * jax.random.normal(k[5], (Cout,), jnp.float32)
        beta2 = 0.1 * jax.random.normal(k[6], (Cout,), jnp.float32)
        return x179, x172, gamma1, beta1, conv_w, gamma2, beta2

    # Case 1: small aligned shape (orig: N=1, Cin=1024, 28x28, Cout=256).
    args = make_inputs(jax.random.PRNGKey(0), 2, 512, 8, 8, 256)
    ref = reference(*args, eps=eps)

    out_f32 = jax.block_until_ready(
        forward(*args, eps=eps, matmul_dtype=jnp.float32))
    assert out_f32.shape == ref.shape
    assert jnp.allclose(out_f32, ref, rtol=1e-3, atol=1e-3), \
        f"f32 max err {jnp.max(jnp.abs(out_f32 - ref))}"

    # bf16 MXU operands (v6e/v7x fast path), f32 accumulation.
    out_bf16 = jax.block_until_ready(forward(*args, eps=eps))
    assert jnp.allclose(out_bf16, ref, rtol=5e-2, atol=5e-2), \
        f"bf16 max err {jnp.max(jnp.abs(out_bf16 - ref))}"

    # Case 2: spatial dims not a multiple of 8 -> exercises the padding/masking
    # path (mirrors the production N=1, 1024, 28x28 -> M=784 case).
    args2 = make_inputs(jax.random.PRNGKey(1), 1, 256, 7, 7, 128)
    ref2 = reference(*args2, eps=eps)
    out2 = jax.block_until_ready(
        forward(*args2, eps=eps, matmul_dtype=jnp.float32))
    assert jnp.allclose(out2, ref2, rtol=1e-3, atol=1e-3), \
        f"padded-path max err {jnp.max(jnp.abs(out2 - ref2))}"

    print("KERNEL_OK")
</pallas_src>

<mosaic_0001>
module attributes {stable_mosaic.version = 11 : i64} {
  func.func @_stats_kernel(%arg0: i32, %arg1: memref<128x512xf32, #tpu.memory_space<vmem>>, %arg2: memref<1x2x512xf32, #tpu.memory_space<vmem>>) attributes {dimension_semantics = [#tpu.dimension_semantics<parallel>], iteration_bounds = array<i64: 1>, scalar_prefetch = 0 : i64, scratch_operands = 0 : i64, tpu.core_type = #tpu.core_type<tc>, window_params = [{transform_indices = @transform_0, window_bounds = array<i64: 128, 512>}, {transform_indices = @transform_1, window_bounds = array<i64: 1, 2, 512>}]} {
    %c0 = arith.constant 0 : index
    %c0_0 = arith.constant 0 : index
    %0 = vector.load %arg1[%c0, %c0_0] : memref<128x512xf32, #tpu.memory_space<vmem>>, vector<128x512xf32>
    %cst = arith.constant dense<0.000000e+00> : vector<512xf32>
    %1 = vector.multi_reduction <add>, %0, %cst [0] : vector<128x512xf32> to vector<512xf32>
    %2 = arith.mulf %0, %0 : vector<128x512xf32>
    %cst_1 = arith.constant dense<0.000000e+00> : vector<512xf32>
    %3 = vector.multi_reduction <add>, %2, %cst_1 [0] : vector<128x512xf32> to vector<512xf32>
    %4 = vector.shape_cast %1 : vector<512xf32> to vector<1x512xf32>
    %5 = vector.shape_cast %3 : vector<512xf32> to vector<1x512xf32>
    %6 = tpu.concatenate %4, %5 in 0 : vector<1x512xf32>, vector<1x512xf32> -> vector<2x512xf32>
    %c0_2 = arith.constant 0 : index
    %c0_3 = arith.constant 0 : index
    %c0_4 = arith.constant 0 : index
    %7 = vector.load %arg2[%c0_2, %c0_3, %c0_4] : memref<1x2x512xf32, #tpu.memory_space<vmem>>, vector<1x2x512xf32>
    %8 = vector.shape_cast %7 : vector<1x2x512xf32> to vector<2x512xf32>
    %9 = vector.shape_cast %6 : vector<2x512xf32> to vector<1x2x512xf32>
    tpu.vector_store %arg2[%c0_2, %c0_3, %c0_4], %9 {strides = array<i32>} : memref<1x2x512xf32, #tpu.memory_space<vmem>>, vector<1x2x512xf32>,
    return
  }
  func.func @transform_0(%arg0: i32) -> (i32, i32) {
    %c0_i32 = arith.constant 0 : i32
    %c0_i32_0 = arith.constant 0 : i32
    return %arg0, %c0_i32 : i32, i32
  }
  func.func @transform_1(%arg0: i32) -> (i32, i32, i32) {
    %c0_i32 = arith.constant 0 : i32
    %c0_i32_0 = arith.constant 0 : i32
    %c0_i32_1 = arith.constant 0 : i32
    return %arg0, %c0_i32, %c0_i32_0 : i32, i32, i32
  }
}

module attributes {stable_mosaic.version = 11 : i64} {
  func.func @_fused_kernel(%arg0: i32, %arg1: memref<128x512xf32, #tpu.memory_space<vmem>>, %arg2: memref<128x512xf32, #tpu.memory_space<vmem>>, %arg3: memref<1x512xf32, #tpu.memory_space<vmem>>, %arg4: memref<1x512xf32, #tpu.memory_space<vmem>>, %arg5: memref<512x256xf32, #tpu.memory_space<vmem>>, %arg6: memref<128x256xf32, #tpu.memory_space<vmem>>, %arg7: memref<1x2x256xf32, #tpu.memory_space<vmem>>) attributes {dimension_semantics = [#tpu.dimension_semantics<parallel>], iteration_bounds = array<i64: 1>, scalar_prefetch = 0 : i64, scratch_operands = 0 : i64, tpu.core_type = #tpu.core_type<tc>, window_params = [{transform_indices = @transform_0, window_bounds = array<i64: 128, 512>}, {transform_indices = @transform_1, window_bounds = array<i64: 128, 512>}, {pipeline_mode = #tpu.pipeline_mode<synchronous>, transform_indices = @transform_2, window_bounds = array<i64: 1, 512>}, {pipeline_mode = #tpu.pipeline_mode<synchronous>, transform_indices = @transform_3, window_bounds = array<i64: 1, 512>}, {pipeline_mode = #tpu.pipeline_mode<synchronous>, transform_indices = @transform_4, window_bounds = array<i64: 512, 256>}, {transform_indices = @transform_5, window_bounds = array<i64: 128, 256>}, {transform_indices = @transform_6, window_bounds = array<i64: 1, 2, 256>}]} {
    %c0 = arith.constant 0 : index
    %c0_0 = arith.constant 0 : index
    %0 = vector.load %arg1[%c0, %c0_0] : memref<128x512xf32, #tpu.memory_space<vmem>>, vector<128x512xf32>
    %c0_1 = arith.constant 0 : index
    %c0_2 = arith.constant 0 : index
    %1 = vector.load %arg3[%c0_1, %c0_2] : memref<1x512xf32, #tpu.memory_space<vmem>>, vector<1x512xf32>
    %2 = vector.broadcast %1 : vector<1x512xf32> to vector<128x512xf32>
    %3 = arith.mulf %0, %2 : vector<128x512xf32>
    %c0_3 = arith.constant 0 : index
    %c0_4 = arith.constant 0 : index
    %4 = vector.load %arg4[%c0_3, %c0_4] : memref<1x512xf32, #tpu.memory_space<vmem>>, vector<1x512xf32>
    %5 = vector.broadcast %4 : vector<1x512xf32> to vector<128x512xf32>
    %6 = arith.addf %3, %5 : vector<128x512xf32>
    %c0_5 = arith.constant 0 : index
    %c0_6 = arith.constant 0 : index
    %7 = vector.load %arg2[%c0_5, %c0_6] : memref<128x512xf32, #tpu.memory_space<vmem>>, vector<128x512xf32>
    %8 = arith.addf %6, %7 : vector<128x512xf32>
    %cst = arith.constant 0.000000e+00 : f32
    %9 = vector.broadcast %cst : f32 to vector<128x512xf32>
    %10 = arith.maximumf %8, %9 : vector<128x512xf32>
    %c0_7 = arith.constant 0 : index
    %c0_8 = arith.constant 0 : index
    %11 = vector.load %arg5[%c0_7, %c0_8] : memref<512x256xf32, #tpu.memory_space<vmem>>, vector<512x256xf32>
    %cst_9 = arith.constant dense<0.000000e+00> : vector<128x256xf32>
    %12 = tpu.matmul %10, %11, %cst_9 {dimension_numbers = #tpu.dot_dimension_numbers<[1], [0], [0], [1], [0, 0, 1, 1], [], []>} : vector<128x512xf32>, vector<512x256xf32>, vector<128x256xf32> -> vector<128x256xf32>
    %c0_10 = arith.constant 0 : index
    %c0_11 = arith.constant 0 : index
    %13 = vector.load %arg6[%c0_10, %c0_11] : memref<128x256xf32, #tpu.memory_space<vmem>>, vector<128x256xf32>
    tpu.vector_store %arg6[%c0_10, %c0_11], %12 {strides = array<i32>} : memref<128x256xf32, #tpu.memory_space<vmem>>, vector<128x256xf32>,
    %cst_12 = arith.constant dense<0.000000e+00> : vector<256xf32>
    %14 = vector.multi_reduction <add>, %12, %cst_12 [0] : vector<128x256xf32> to vector<256xf32>
    %15 = arith.mulf %12, %12 : vector<128x256xf32>
    %cst_13 = arith.constant dense<0.000000e+00> : vector<256xf32>
    %16 = vector.multi_reduction <add>, %15, %cst_13 [0] : vector<128x256xf32> to vector<256xf32>
    %17 = vector.shape_cast %14 : vector<256xf32> to vector<1x256xf32>
    %18 = vector.shape_cast %16 : vector<256xf32> to vector<1x256xf32>
    %19 = tpu.concatenate %17, %18 in 0 : vector<1x256xf32>, vector<1x256xf32> -> vector<2x256xf32>
    %c0_14 = arith.constant 0 : index
    %c0_15 = arith.constant 0 : index
    %c0_16 = arith.constant 0 : index
    %20 = vector.load %arg7[%c0_14, %c0_15, %c0_16] : memref<1x2x256xf32, #tpu.memory_space<vmem>>, vector<1x2x256xf32>
    %21 = vector.shape_cast %20 : vector<1x2x256xf32> to vector<2x256xf32>
    %22 = vector.shape_cast %19 : vector<2x256xf32> to vector<1x2x256xf32>
    tpu.vector_store %arg7[%c0_14, %c0_15, %c0_16], %22 {strides = array<i32>} : memref<1x2x256xf32, #tpu.memory_space<vmem>>, vector<1x2x256xf32>,
    return
  }
  func.func @transform_0(%arg0: i32) -> (i32, i32) {
    %c0_i32 = arith.constant 0 : i32
    %c0_i32_0 = arith.constant 0 : i32
    return %arg0, %c0_i32 : i32, i32
  }
  func.func @transform_1(%arg0: i32) -> (i32, i32) {
    %c0_i32 = arith.constant 0 : i32
    %c0_i32_0 = arith.constant 0 : i32
    return %arg0, %c0_i32 : i32, i32
  }
  func.func @transform_2(%arg0: i32) -> (i32, i32) {
    %c0_i32 = arith.constant 0 : i32
    %c0_i32_0 = arith.constant 0 : i32
    %c0_i32_1 = arith.constant 0 : i32
    return %c0_i32, %c0_i32_0 : i32, i32
  }
  func.func @transform_3(%arg0: i32) -> (i32, i32) {
    %c0_i32 = arith.constant 0 : i32
    %c0_i32_0 = arith.constant 0 : i32
    %c0_i32_1 = arith.constant 0 : i32
    return %c0_i32, %c0_i32_0 : i32, i32
  }
  func.func @transform_4(%arg0: i32) -> (i32, i32) {
    %c0_i32 = arith.constant 0 : i32
    %c0_i32_0 = arith.constant 0 : i32
    %c0_i32_1 = arith.constant 0 : i32
    return %c0_i32, %c0_i32_0 : i32, i32
  }
  func.func @transform_5(%arg0: i32) -> (i32, i32) {
    %c0_i32 = arith.constant 0 : i32
    %c0_i32_0 = arith.constant 0 : i32
    return %arg0, %c0_i32 : i32, i32
  }
  func.func @transform_6(%arg0: i32) -> (i32, i32, i32) {
    %c0_i32 = arith.constant 0 : i32
    %c0_i32_0 = arith.constant 0 : i32
    %c0_i32_1 = arith.constant 0 : i32
    return %arg0, %c0_i32, %c0_i32_0 : i32, i32, i32
  }
}

module attributes {stable_mosaic.version = 11 : i64} {
  func.func @_affine_kernel(%arg0: i32, %arg1: memref<128x256xf32, #tpu.memory_space<vmem>>, %arg2: memref<1x256xf32, #tpu.memory_space<vmem>>, %arg3: memref<1x256xf32, #tpu.memory_space<vmem>>, %arg4: memref<128x256xf32, #tpu.memory_space<vmem>>) attributes {dimension_semantics = [#tpu.dimension_semantics<parallel>], iteration_bounds = array<i64: 1>, scalar_prefetch = 0 : i64, scratch_operands = 0 : i64, tpu.core_type = #tpu.core_type<tc>, window_params = [{transform_indices = @transform_0, window_bounds = array<i64: 128, 256>}, {pipeline_mode = #tpu.pipeline_mode<synchronous>, transform_indices = @transform_1, window_bounds = array<i64: 1, 256>}, {pipeline_mode = #tpu.pipeline_mode<synchronous>, transform_indices = @transform_2, window_bounds = array<i64: 1, 256>}, {transform_indices = @transform_3, window_bounds = array<i64: 128, 256>}]} {
    %c0 = arith.constant 0 : index
    %c0_0 = arith.constant 0 : index
    %0 = vector.load %arg1[%c0, %c0_0] : memref<128x256xf32, #tpu.memory_space<vmem>>, vector<128x256xf32>
    %c0_1 = arith.constant 0 : index
    %c0_2 = arith.constant 0 : index
    %1 = vector.load %arg2[%c0_1, %c0_2] : memref<1x256xf32, #tpu.memory_space<vmem>>, vector<1x256xf32>
    %2 = vector.broadcast %1 : vector<1x256xf32> to vector<128x256xf32>
    %3 = arith.mulf %0, %2 : vector<128x256xf32>
    %c0_3 = arith.constant 0 : index
    %c0_4 = arith.constant 0 : index
    %4 = vector.load %arg3[%c0_3, %c0_4] : memref<1x256xf32, #tpu.memory_space<vmem>>, vector<1x256xf32>
    %5 = vector.broadcast %4 : vector<1x256xf32> to vector<128x256xf32>
    %6 = arith.addf %3, %5 : vector<128x256xf32>
    %c0_5 = arith.constant 0 : index
    %c0_6 = arith.constant 0 : index
    %7 = vector.load %arg4[%c0_5, %c0_6] : memref<128x256xf32, #tpu.memory_space<vmem>>, vector<128x256xf32>
    tpu.vector_store %arg4[%c0_5, %c0_6], %6 {strides = array<i32>} : memref<128x256xf32, #tpu.memory_space<vmem>>, vector<128x256xf32>,
    return
  }
  func.func @transform_0(%arg0: i32) -> (i32, i32) {
    %c0_i32 = arith.constant 0 : i32
    %c0_i32_0 = arith.constant 0 : i32
    return %arg0, %c0_i32 : i32, i32
  }
  func.func @transform_1(%arg0: i32) -> (i32, i32) {
    %c0_i32 = arith.constant 0 : i32
    %c0_i32_0 = arith.constant 0 : i32
    %c0_i32_1 = arith.constant 0 : i32
    return %c0_i32, %c0_i32_0 : i32, i32
  }
  func.func @transform_2(%arg0: i32) -> (i32, i32) {
    %c0_i32 = arith.constant 0 : i32
    %c0_i32_0 = arith.constant 0 : i32
    %c0_i32_1 = arith.constant 0 : i32
    return %c0_i32, %c0_i32_0 : i32, i32
  }
  func.func @transform_3(%arg0: i32) -> (i32, i32) {
    %c0_i32 = arith.constant 0 : i32
    %c0_i32_0 = arith.constant 0 : i32
    return %arg0, %c0_i32 : i32, i32
  }
}

</mosaic_0001>

<llo_original>
// kernel: forward.3
$region0: #{forward.3}
  #allocation0 [shape = 'u32[]', space=smem, size = 0x4, offset = 0x4, fixed_abs, tag = 'smem constant byte address 0x4 - core index']
  #allocation1 [shape = 'u32[144,128]{1,0:T(1,128)}', space=vmem, size = 0x12000, scoped, tag = 'internal scratch']
  %s0 = inlined_call_operand.hbm [shape: f32[128,512], index: 0, kind: input, shape index: {}]
  %s1 = inlined_call_operand.vmem [shape: f32[1,2,512], index: 1, kind: output, shape index: {}]
  %s2 = sld [smem:[#allocation0]]
  $region18: #{forward.3} parent=0
    _
  %s4 = ssub.s32 1, %s2
  %s5 = scalar_select 0, %s4, %s2
  $region1: #{forward.3} parent=0
    #allocation2 [shape = 'u8[262144]{0}', space=vmem, size = 0x40000, scoped, tag = 'input window, operand 0, single buffered']
    #allocation3 [shape = 's32[1]{0}', space=sflag, size = 0x4, scoped, tag = 'scoped memory for forward.3']
    %6 = vsyncpa [#allocation3], 0
    // Predicated region
    $region2: #{forward.3} parent=1 // pred_check
      _
    $region3: #{forward.3} parent=1 // pred_check_branch
      %8 = sbr.rel (0) target = $region5
    $region4: #{forward.3} parent=1 // pred_region
      %s10 = ssub.s32 8192, 8192
      %11 = vsyncadd [#allocation3], %s10
      %s12 = sshll.u32 [#allocation2], 4
      %s13 = int_to_ptr.vmem [resolvable:$true] %s12
      %18 = dma.hbm_to_vmem [thread:$0]  %s0, 8192, %s13, [#allocation3], 512, 512, 32
    $region5: #{forward.3} parent=1 // pred_fallthru
      _
    // Predicated region
    $region6: #{forward.3} parent=1 // pred_check
      _
    $region7: #{forward.3} parent=1 // pred_check_branch
      %20 = sbr.rel (0) target = $region9
    $region8: #{forward.3} parent=1 // pred_region
      %21 = dma.done [#allocation3], 8192
    $region9: #{forward.3} parent=1 // pred_fallthru
      _
    %v22 = vld [vmem:[#allocation2] sm:$0xff]
    %v23 = vld [vmem:[#allocation2 + $0x8] sm:$0xff]
    %v24 = vld [vmem:[#allocation2 + $0x10] sm:$0xff]
    %v25 = vld [vmem:[#allocation2 + $0x18] sm:$0xff]
    %v26 = vld [vmem:[#allocation2 + $0x20] sm:$0xff]
    %v27 = vld [vmem:[#allocation2 + $0x28] sm:$0xff]
    %v28 = vld [vmem:[#allocation2 + $0x30] sm:$0xff]
    %v29 = vld [vmem:[#allocation2 + $0x38] sm:$0xff]
    %v30 = vld [vmem:[#allocation2 + $0x40] sm:$0xff]
    %v31 = vld [vmem:[#allocation2 + $0x48] sm:$0xff]
    %v32 = vld [vmem:[#allocation2 + $0x50] sm:$0xff]
    %v33 = vld [vmem:[#allocation2 + $0x58] sm:$0xff]
    %v34 = vld [vmem:[#allocation2 + $0x60] sm:$0xff]
    %v35 = vld [vmem:[#allocation2 + $0x68] sm:$0xff]
    %v36 = vld [vmem:[#allocation2 + $0x70] sm:$0xff]
    %v37 = vld [vmem:[#allocation2 + $0x78] sm:$0xff]
    %v38 = vld [vmem:[#allocation2 + $0x80] sm:$0xff]
    %v39 = vld [vmem:[#allocation2 + $0x88] sm:$0xff]
    %v40 = vld [vmem:[#allocation2 + $0x90] sm:$0xff]
    %v41 = vld [vmem:[#allocation2 + $0x98] sm:$0xff]
    %v42 = vld [vmem:[#allocation2 + $0xa0] sm:$0xff]
    %v43 = vld [vmem:[#allocation2 + $0xa8] sm:$0xff]
    %v44 = vld [vmem:[#allocation2 + $0xb0] sm:$0xff]
    %v45 = vld [vmem:[#allocation2 + $0xb8] sm:$0xff]
    %v46 = vld [vmem:[#allocation2 + $0xc0] sm:$0xff]
    %v47 = vld [vmem:[#allocation2 + $0xc8] sm:$0xff]
    %v48 = vld [vmem:[#allocation2 + $0xd0] sm:$0xff]
    %v49 = vld [vmem:[#allocation2 + $0xd8] sm:$0xff]
    %v50 = vld [vmem:[#allocation2 + $0xe0] sm:$0xff]
    %v51 = vld [vmem:[#allocation2 + $0xe8] sm:$0xff]
    %v52 = vld [vmem:[#allocation2 + $0xf0] sm:$0xff]
    %v53 = vld [vmem:[#allocation2 + $0xf8] sm:$0xff]
    %v54 = vld [vmem:[#allocation2 + $0x100] sm:$0xff]
    %v55 = vld [vmem:[#allocation2 + $0x108] sm:$0xff]
    %v56 = vld [vmem:[#allocation2 + $0x110] sm:$0xff]
    %v57 = vld [vmem:[#allocation2 + $0x118] sm:$0xff]
    %v58 = vld [vmem:[#allocation2 + $0x120] sm:$0xff]
    %v59 = vld [vmem:[#allocation2 + $0x128] sm:$0xff]
    %v60 = vld [vmem:[#allocation2 + $0x130] sm:$0xff]
    %v61 = vld [vmem:[#allocation2 + $0x138] sm:$0xff]
    %v62 = vld [vmem:[#allocation2 + $0x140] sm:$0xff]
    %v63 = vld [vmem:[#allocation2 + $0x148] sm:$0xff]
    %v64 = vld [vmem:[#allocation2 + $0x150] sm:$0xff]
    %v65 = vld [vmem:[#allocation2 + $0x158] sm:$0xff]
    %v66 = vld [vmem:[#allocation2 + $0x160] sm:$0xff]
    %v67 = vld [vmem:[#allocation2 + $0x168] sm:$0xff]
    %v68 = vld [vmem:[#allocation2 + $0x170] sm:$0xff]
    %v69 = vld [vmem:[#allocation2 + $0x178] sm:$0xff]
    %v70 = vld [vmem:[#allocation2 + $0x180] sm:$0xff]
    %v71 = vld [vmem:[#allocation2 + $0x188] sm:$0xff]
    %v72 = vld [vmem:[#allocation2 + $0x190] sm:$0xff]
    %v73 = vld [vmem:[#allocation2 + $0x198] sm:$0xff]
    %v74 = vld [vmem:[#allocation2 + $0x1a0] sm:$0xff]
    %v75 = vld [vmem:[#allocation2 + $0x1a8] sm:$0xff]
    %v76 = vld [vmem:[#allocation2 + $0x1b0] sm:$0xff]
    %v77 = vld [vmem:[#allocation2 + $0x1b8] sm:$0xff]
    %v78 = vld [vmem:[#allocation2 + $0x1c0] sm:$0xff]
    %v79 = vld [vmem:[#allocation2 + $0x1c8] sm:$0xff]
    %v80 = vld [vmem:[#allocation2 + $0x1d0] sm:$0xff]
    %v81 = vld [vmem:[#allocation2 + $0x1d8] sm:$0xff]
    %v82 = vld [vmem:[#allocation2 + $0x1e0] sm:$0xff]
    %v83 = vld [vmem:[#allocation2 + $0x1e8] sm:$0xff]
    %v84 = vld [vmem:[#allocation2 + $0x1f0] sm:$0xff]
    %v85 = vld [vmem:[#allocation2 + $0x1f8] sm:$0xff]
    %v86 = vadd.f32 %v22, %v26
    %v87 = vadd.f32 %v86, %v30
    %v88 = vadd.f32 %v87, %v34
    %v89 = vadd.f32 %v88, %v38
    %v90 = vadd.f32 %v89, %v42
    %v91 = vadd.f32 %v90, %v46
    %v92 = vadd.f32 %v91, %v50
    %v93 = vadd.f32 %v92, %v54
    %v94 = vadd.f32 %v93, %v58
    %v95 = vadd.f32 %v94, %v62
    %v96 = vadd.f32 %v95, %v66
    %v97 = vadd.f32 %v96, %v70
    %v98 = vadd.f32 %v97, %v74
    %v99 = vadd.f32 %v98, %v78
    %v100 = vadd.f32 %v99, %v82
    %v101 = vrot.slane %v100, 4
    %v102 = vadd.f32 %v100, %v101
    %v103 = vrot.slane %v102, 2
    %v104 = vadd.f32 %v102, %v103
    %v105 = vrot.slane %v104, 1
    %v106 = vadd.f32 %v104, %v105
    %v107 = vadd.f32 %v23, %v27
    %v108 = vadd.f32 %v107, %v31
    %v109 = vadd.f32 %v108, %v35
    %v110 = vadd.f32 %v109, %v39
    %v111 = vadd.f32 %v110, %v43
    %v112 = vadd.f32 %v111, %v47
    %v113 = vadd.f32 %v112, %v51
    %v114 = vadd.f32 %v113, %v55
    %v115 = vadd.f32 %v114, %v59
    %v116 = vadd.f32 %v115, %v63
    %v117 = vadd.f32 %v116, %v67
    %v118 = vadd.f32 %v117, %v71
    %v119 = vadd.f32 %v118, %v75
    %v120 = vadd.f32 %v119, %v79
    %v121 = vadd.f32 %v120, %v83
    %v122 = vrot.slane %v121, 4
    %v123 = vadd.f32 %v121, %v122
    %v124 = vrot.slane %v123, 2
    %v125 = vadd.f32 %v123, %v124
    %v126 = vrot.slane %v125, 1
    %v127 = vadd.f32 %v125, %v126
    %v128 = vadd.f32 %v24, %v28
    %v129 = vadd.f32 %v128, %v32
    %v130 = vadd.f32 %v129, %v36
    %v131 = vadd.f32 %v130, %v40
    %v132 = vadd.f32 %v131, %v44
    %v133 = vadd.f32 %v132, %v48
    %v134 = vadd.f32 %v133, %v52
    %v135 = vadd.f32 %v134, %v56
    %v136 = vadd.f32 %v135, %v60
    %v137 = vadd.f32 %v136, %v64
    %v138 = vadd.f32 %v137, %v68
    %v139 = vadd.f32 %v138, %v72
    %v140 = vadd.f32 %v139, %v76
    %v141 = vadd.f32 %v140, %v80
    %v142 = vadd.f32 %v141, %v84
    %v143 = vrot.slane %v142, 4
    %v144 = vadd.f32 %v142, %v143
    %v145 = vrot.slane %v144, 2
    %v146 = vadd.f32 %v144, %v145
    %v147 = vrot.slane %v146, 1
    %v148 = vadd.f32 %v146, %v147
    %v149 = vadd.f32 %v25, %v29
    %v150 = vadd.f32 %v149, %v33
    %v151 = vadd.f32 %v150, %v37
    %v152 = vadd.f32 %v151, %v41
    %v153 = vadd.f32 %v152, %v45
    %v154 = vadd.f32 %v153, %v49
    %v155 = vadd.f32 %v154, %v53
    %v156 = vadd.f32 %v155, %v57
    %v157 = vadd.f32 %v156, %v61
    %v158 = vadd.f32 %v157, %v65
    %v159 = vadd.f32 %v158, %v69
    %v160 = vadd.f32 %v159, %v73
    %v161 = vadd.f32 %v160, %v77
    %v162 = vadd.f32 %v161, %v81
    %v163 = vadd.f32 %v162, %v85
    %v164 = vrot.slane %v163, 4
    %v165 = vadd.f32 %v163, %v164
    %v166 = vrot.slane %v165, 2
    %v167 = vadd.f32 %v165, %v166
    %v168 = vrot.slane %v167, 1
    %v169 = vadd.f32 %v167, %v168
    %v170 = vmul.f32 %v22, %v22
    %v171 = vmul.f32 %v23, %v23
    %v172 = vmul.f32 %v24, %v24
    %v173 = vmul.f32 %v25, %v25
    %v174 = vmul.f32 %v26, %v26
    %v175 = vmul.f32 %v27, %v27
    %v176 = vmul.f32 %v28, %v28
    %v177 = vmul.f32 %v29, %v29
    %v178 = vmul.f32 %v30, %v30
    %v179 = vmul.f32 %v31, %v31
    %v180 = vmul.f32 %v32, %v32
    %v181 = vmul.f32 %v33, %v33
    %v182 = vmul.f32 %v34, %v34
    %v183 = vmul.f32 %v35, %v35
    %v184 = vmul.f32 %v36, %v36
    %v185 = vmul.f32 %v37, %v37
    %v186 = vmul.f32 %v38, %v38
    %v187 = vmul.f32 %v39, %v39
    %v188 = vmul.f32 %v40, %v40
    %v189 = vmul.f32 %v41, %v41
    %v190 = vmul.f32 %v42, %v42
    %v191 = vmul.f32 %v43, %v43
    %v192 = vmul.f32 %v44, %v44
    %v193 = vmul.f32 %v45, %v45
    %v194 = vmul.f32 %v46, %v46
    %v195 = vmul.f32 %v47, %v47
    %v196 = vmul.f32 %v48, %v48
    %v197 = vmul.f32 %v49, %v49
    %v198 = vmul.f32 %v50, %v50
    %v199 = vmul.f32 %v51, %v51
    %v200 = vmul.f32 %v52, %v52
    %v201 = vmul.f32 %v53, %v53
    %v202 = vmul.f32 %v54, %v54
    %v203 = vmul.f32 %v55, %v55
    %v204 = vmul.f32 %v56, %v56
    %v205 = vmul.f32 %v57, %v57
    %v206 = vmul.f32 %v58, %v58
    %v207 = vmul.f32 %v59, %v59
    %v208 = vmul.f32 %v60, %v60
    %v209 = vmul.f32 %v61, %v61
    %v210 = vmul.f32 %v62, %v62
    %v211 = vmul.f32 %v63, %v63
    %v212 = vmul.f32 %v64, %v64
    %v213 = vmul.f32 %v65, %v65
    %v214 = vmul.f32 %v66, %v66
    %v215 = vmul.f32 %v67, %v67
    %v216 = vmul.f32 %v68, %v68
    %v217 = vmul.f32 %v69, %v69
    %v218 = vmul.f32 %v70, %v70
    %v219 = vmul.f32 %v71, %v71
    %v220 = vmul.f32 %v72, %v72
    %v221 = vmul.f32 %v73, %v73
    %v222 = vmul.f32 %v74, %v74
    %v223 = vmul.f32 %v75, %v75
    %v224 = vmul.f32 %v76, %v76
    %v225 = vmul.f32 %v77, %v77
    %v226 = vmul.f32 %v78, %v78
    %v227 = vmul.f32 %v79, %v79
    %v228 = vmul.f32 %v80, %v80
    %v229 = vmul.f32 %v81, %v81
    %v230 = vmul.f32 %v82, %v82
    %v231 = vmul.f32 %v83, %v83
    %v232 = vmul.f32 %v84, %v84
    %v233 = vmul.f32 %v85, %v85
    %v234 = vadd.f32 %v170, %v174
    %v235 = vadd.f32 %v234, %v178
    %v236 = vadd.f32 %v235, %v182
    %v237 = vadd.f32 %v236, %v186
    %v238 = vadd.f32 %v237, %v190
    %v239 = vadd.f32 %v238, %v194
    %v240 = vadd.f32 %v239, %v198
    %v241 = vadd.f32 %v240, %v202
    %v242 = vadd.f32 %v241, %v206
    %v243 = vadd.f32 %v242, %v210
    %v244 = vadd.f32 %v243, %v214
    %v245 = vadd.f32 %v244, %v218
    %v246 = vadd.f32 %v245, %v222
    %v247 = vadd.f32 %v246, %v226
    %v248 = vadd.f32 %v247, %v230
    %v249 = vrot.slane %v248, 4
    %v250 = vadd.f32 %v248, %v249
    %v251 = vrot.slane %v250, 2
    %v252 = vadd.f32 %v250, %v251
    %v253 = vrot.slane %v252, 1
    %v254 = vadd.f32 %v252, %v253
    %v255 = vadd.f32 %v171, %v175
    %v256 = vadd.f32 %v255, %v179
    %v257 = vadd.f32 %v256, %v183
    %v258 = vadd.f32 %v257, %v187
    %v259 = vadd.f32 %v258, %v191
    %v260 = vadd.f32 %v259, %v195
    %v261 = vadd.f32 %v260, %v199
    %v262 = vadd.f32 %v261, %v203
    %v263 = vadd.f32 %v262, %v207
    %v264 = vadd.f32 %v263, %v211
    %v265 = vadd.f32 %v264, %v215
    %v266 = vadd.f32 %v265, %v219
    %v267 = vadd.f32 %v266, %v223
    %v268 = vadd.f32 %v267, %v227
    %v269 = vadd.f32 %v268, %v231
    %v270 = vrot.slane %v269, 4
    %v271 = vadd.f32 %v269, %v270
    %v272 = vrot.slane %v271, 2
    %v273 = vadd.f32 %v271, %v272
    %v274 = vrot.slane %v273, 1
    %v275 = vadd.f32 %v273, %v274
    %v276 = vadd.f32 %v172, %v176
    %v277 = vadd.f32 %v276, %v180
    %v278 = vadd.f32 %v277, %v184
    %v279 = vadd.f32 %v278, %v188
    %v280 = vadd.f32 %v279, %v192
    %v281 = vadd.f32 %v280, %v196
    %v282 = vadd.f32 %v281, %v200
    %v283 = vadd.f32 %v282, %v204
    %v284 = vadd.f32 %v283, %v208
    %v285 = vadd.f32 %v284, %v212
    %v286 = vadd.f32 %v285, %v216
    %v287 = vadd.f32 %v286, %v220
    %v288 = vadd.f32 %v287, %v224
    %v289 = vadd.f32 %v288, %v228
    %v290 = vadd.f32 %v289, %v232
    %v291 = vrot.slane %v290, 4
    %v292 = vadd.f32 %v290, %v291
    %v293 = vrot.slane %v292, 2
    %v294 = vadd.f32 %v292, %v293
    %v295 = vrot.slane %v294, 1
    %v296 = vadd.f32 %v294, %v295
    %v297 = vadd.f32 %v173, %v177
    %v298 = vadd.f32 %v297, %v181
    %v299 = vadd.f32 %v298, %v185
    %v300 = vadd.f32 %v299, %v189
    %v301 = vadd.f32 %v300, %v193
    %v302 = vadd.f32 %v301, %v197
    %v303 = vadd.f32 %v302, %v201
    %v304 = vadd.f32 %v303, %v205
    %v305 = vadd.f32 %v304, %v209
    %v306 = vadd.f32 %v305, %v213
    %v307 = vadd.f32 %v306, %v217
    %v308 = vadd.f32 %v307, %v221
    %v309 = vadd.f32 %v308, %v225
    %v310 = vadd.f32 %v309, %v229
    %v311 = vadd.f32 %v310, %v233
    %v312 = vrot.slane %v311, 4
    %v313 = vadd.f32 %v311, %v312
    %v314 = vrot.slane %v313, 2
    %v315 = vadd.f32 %v313, %v314
    %v316 = vrot.slane %v315, 1
    %v317 = vadd.f32 %v315, %v316
    %vm318 = vcmask 1040384
    %v319 = vsel %vm318, %v106, %v254
    %v320 = vsel %vm318, %v127, %v275
    %v321 = vsel %vm318, %v148, %v296
    %v322 = vsel %vm318, %v169, %v317
    %v327 = vcombine.low %v319, %v320
    %v328 = vcombine.low %v321, %v322
    %v330 = vunpack.c.l.s4 1983009808
    %v331 = vunpack.c.0.s8 %v330
    %v332 = vlaneseq
    %v333 = vshrl.u32 %v332, 7
    %v334 = vsub.s32 %v331, %v333
    %v335 = vrot.slane %v327, %v334
    %v337 = vunpack.c.l.s4 1983009808
    %v338 = vunpack.c.0.s8 %v337
    %v339 = vlaneseq
    %v340 = vshrl.u32 %v339, 7
    %v341 = vsub.s32 %v338, %v340
    %v342 = vrot.slane %v328, %v341
    %v343 = vcombine.low %v335, %v342
    %345 = vst [vmem:[%s1] sm:$0xff] %v343
    // Predicated region
    $region10: #{forward.3} parent=1 // pred_check
      _
    $region11: #{forward.3} parent=1 // pred_check_branch
      %347 = sbr.rel (0) target = $region13
    $region12: #{forward.3} parent=1 // pred_region
      _
    $region13: #{forward.3} parent=1 // pred_fallthru
      _
    // Predicated region
    $region14: #{forward.3} parent=1 // pred_check
      _
    $region15: #{forward.3} parent=1 // pred_check_branch
      %349 = sbr.rel (0) target = $region17
    $region16: #{forward.3} parent=1 // pred_region
      _
    $region17: #{forward.3} parent=1 // pred_fallthru
      _
    %350 = vsyncpa [#allocation3], 1

// kernel: forward.5
$region0: #{forward.5}
  #allocation0 [shape = 'u32[]', space=smem, size = 0x4, offset = 0x4, fixed_abs, tag = 'smem constant byte address 0x4 - core index']
  #allocation1 [shape = 'u32[144,128]{1,0:T(1,128)}', space=vmem, size = 0x12000, scoped, tag = 'internal scratch']
  %s0 = inlined_call_operand.vmem [shape: f32[128,256], index: 0, kind: input, shape index: {}]
  %s1 = inlined_call_operand.vmem [shape: f32[1,256], index: 1, kind: input, shape index: {}]
  %s2 = inlined_call_operand.vmem [shape: f32[1,256], index: 2, kind: input, shape index: {}]
  %s3 = inlined_call_operand.hbm [shape: f32[128,256], index: 3, kind: output, shape index: {}]
  %s4 = sld [smem:[#allocation0]]
  $region22: #{forward.5} parent=0
    _
  %s6 = ssub.s32 1, %s4
  %s7 = scalar_select 0, %s6, %s4
  $region1: #{forward.5} parent=0
    #allocation2 [shape = 'u8[131072]{0}', space=vmem, size = 0x20000, scoped, tag = 'output window, operand 0, single buffered']
    #allocation3 [shape = 's32[1]{0}', space=sflag, size = 0x4, scoped, tag = 'scoped memory for forward.5']
    %8 = vsyncpa [#allocation3], 0
    // Predicated region
    $region2: #{forward.5} parent=1 // pred_check
      _
    $region3: #{forward.5} parent=1 // pred_check_branch
      %10 = sbr.rel (0) target = $region5
    $region4: #{forward.5} parent=1 // pred_region
      _
    $region5: #{forward.5} parent=1 // pred_fallthru
      _
    // Predicated region
    $region6: #{forward.5} parent=1 // pred_check
      _
    $region7: #{forward.5} parent=1 // pred_check_branch
      %12 = sbr.rel (0) target = $region9
    $region8: #{forward.5} parent=1 // pred_region
      _
    $region9: #{forward.5} parent=1 // pred_fallthru
      _
    // Predicated region
    $region10: #{forward.5} parent=1 // pred_check
      _
    $region11: #{forward.5} parent=1 // pred_check_branch
      %14 = sbr.rel (0) target = $region13
    $region12: #{forward.5} parent=1 // pred_region
      _
    $region13: #{forward.5} parent=1 // pred_fallthru
      _
    %v15 = vld [vmem:[%s0] sm:$0xff]
    %v16 = vld [vmem:[%s0 + $0x8] sm:$0xff]
    %v17 = vld [vmem:[%s0 + $0x10] sm:$0xff]
    %v18 = vld [vmem:[%s0 + $0x18] sm:$0xff]
    %v19 = vld [vmem:[%s0 + $0x20] sm:$0xff]
    %v20 = vld [vmem:[%s0 + $0x28] sm:$0xff]
    %v21 = vld [vmem:[%s0 + $0x30] sm:$0xff]
    %v22 = vld [vmem:[%s0 + $0x38] sm:$0xff]
    %v23 = vld [vmem:[%s0 + $0x40] sm:$0xff]
    %v24 = vld [vmem:[%s0 + $0x48] sm:$0xff]
    %v25 = vld [vmem:[%s0 + $0x50] sm:$0xff]
    %v26 = vld [vmem:[%s0 + $0x58] sm:$0xff]
    %v27 = vld [vmem:[%s0 + $0x60] sm:$0xff]
    %v28 = vld [vmem:[%s0 + $0x68] sm:$0xff]
    %v29 = vld [vmem:[%s0 + $0x70] sm:$0xff]
    %v30 = vld [vmem:[%s0 + $0x78] sm:$0xff]
    %v31 = vld [vmem:[%s0 + $0x80] sm:$0xff]
    %v32 = vld [vmem:[%s0 + $0x88] sm:$0xff]
    %v33 = vld [vmem:[%s0 + $0x90] sm:$0xff]
    %v34 = vld [vmem:[%s0 + $0x98] sm:$0xff]
    %v35 = vld [vmem:[%s0 + $0xa0] sm:$0xff]
    %v36 = vld [vmem:[%s0 + $0xa8] sm:$0xff]
    %v37 = vld [vmem:[%s0 + $0xb0] sm:$0xff]
    %v38 = vld [vmem:[%s0 + $0xb8] sm:$0xff]
    %v39 = vld [vmem:[%s0 + $0xc0] sm:$0xff]
    %v40 = vld [vmem:[%s0 + $0xc8] sm:$0xff]
    %v41 = vld [vmem:[%s0 + $0xd0] sm:$0xff]
    %v42 = vld [vmem:[%s0 + $0xd8] sm:$0xff]
    %v43 = vld [vmem:[%s0 + $0xe0] sm:$0xff]
    %v44 = vld [vmem:[%s0 + $0xe8] sm:$0xff]
    %v45 = vld [vmem:[%s0 + $0xf0] sm:$0xff]
    %v46 = vld [vmem:[%s0 + $0xf8] sm:$0xff]
    %v47 = vld [vmem:[%s1] sm:$0x3]
    %v49 = vlaneseq
    %v50 = vshrl.u32 %v49, 7
    %v51 = vsub.s32 0, %v50
    %v52 = vrot.slane %v47, %v51
    %v53 = vlaneseq
    %v54 = vshrl.u32 %v53, 7
    %v55 = vsub.s32 1, %v54
    %v56 = vrot.slane %v47, %v55
    %v59 = vmul.f32 %v15, %v52
    %v60 = vmul.f32 %v16, %v56
    %v61 = vmul.f32 %v17, %v52
    %v62 = vmul.f32 %v18, %v56
    %v63 = vmul.f32 %v19, %v52
    %v64 = vmul.f32 %v20, %v56
    %v65 = vmul.f32 %v21, %v52
    %v66 = vmul.f32 %v22, %v56
    %v67 = vmul.f32 %v23, %v52
    %v68 = vmul.f32 %v24, %v56
    %v69 = vmul.f32 %v25, %v52
    %v70 = vmul.f32 %v26, %v56
    %v71 = vmul.f32 %v27, %v52
    %v72 = vmul.f32 %v28, %v56
    %v73 = vmul.f32 %v29, %v52
    %v74 = vmul.f32 %v30, %v56
    %v75 = vmul.f32 %v31, %v52
    %v76 = vmul.f32 %v32, %v56
    %v77 = vmul.f32 %v33, %v52
    %v78 = vmul.f32 %v34, %v56
    %v79 = vmul.f32 %v35, %v52
    %v80 = vmul.f32 %v36, %v56
    %v81 = vmul.f32 %v37, %v52
    %v82 = vmul.f32 %v38, %v56
    %v83 = vmul.f32 %v39, %v52
    %v84 = vmul.f32 %v40, %v56
    %v85 = vmul.f32 %v41, %v52
    %v86 = vmul.f32 %v42, %v56
    %v87 = vmul.f32 %v43, %v52
    %v88 = vmul.f32 %v44, %v56
    %v89 = vmul.f32 %v45, %v52
    %v90 = vmul.f32 %v46, %v56
    %v91 = vld [vmem:[%s2] sm:$0x3]
    %v93 = vlaneseq
    %v94 = vshrl.u32 %v93, 7
    %v95 = vsub.s32 0, %v94
    %v96 = vrot.slane %v91, %v95
    %v97 = vlaneseq
    %v98 = vshrl.u32 %v97, 7
    %v99 = vsub.s32 1, %v98
    %v100 = vrot.slane %v91, %v99
    %v103 = vadd.f32 %v59, %v96
    %v104 = vadd.f32 %v60, %v100
    %v105 = vadd.f32 %v61, %v96
    %v106 = vadd.f32 %v62, %v100
    %v107 = vadd.f32 %v63, %v96
    %v108 = vadd.f32 %v64, %v100
    %v109 = vadd.f32 %v65, %v96
    %v110 = vadd.f32 %v66, %v100
    %v111 = vadd.f32 %v67, %v96
    %v112 = vadd.f32 %v68, %v100
    %v113 = vadd.f32 %v69, %v96
    %v114 = vadd.f32 %v70, %v100
    %v115 = vadd.f32 %v71, %v96
    %v116 = vadd.f32 %v72, %v100
    %v117 = vadd.f32 %v73, %v96
    %v118 = vadd.f32 %v74, %v100
    %v119 = vadd.f32 %v75, %v96
    %v120 = vadd.f32 %v76, %v100
    %v121 = vadd.f32 %v77, %v96
    %v122 = vadd.f32 %v78, %v100
    %v123 = vadd.f32 %v79, %v96
    %v124 = vadd.f32 %v80, %v100
    %v125 = vadd.f32 %v81, %v96
    %v126 = vadd.f32 %v82, %v100
    %v127 = vadd.f32 %v83, %v96
    %v128 = vadd.f32 %v84, %v100
    %v129 = vadd.f32 %v85, %v96
    %v130 = vadd.f32 %v86, %v100
    %v131 = vadd.f32 %v87, %v96
    %v132 = vadd.f32 %v88, %v100
    %v133 = vadd.f32 %v89, %v96
    %v134 = vadd.f32 %v90, %v100
    %135 = vst [vmem:[#allocation2] sm:$0xff] %v103
    %136 = vst [vmem:[#allocation2 + $0x8] sm:$0xff] %v104
    %137 = vst [vmem:[#allocation2 + $0x10] sm:$0xff] %v105
    %138 = vst [vmem:[#allocation2 + $0x18] sm:$0xff] %v106
    %139 = vst [vmem:[#allocation2 + $0x20] sm:$0xff] %v107
    %140 = vst [vmem:[#allocation2 + $0x28] sm:$0xff] %v108
    %141 = vst [vmem:[#allocation2 + $0x30] sm:$0xff] %v109
    %142 = vst [vmem:[#allocation2 + $0x38] sm:$0xff] %v110
    %143 = vst [vmem:[#allocation2 + $0x40] sm:$0xff] %v111
    %144 = vst [vmem:[#allocation2 + $0x48] sm:$0xff] %v112
    %145 = vst [vmem:[#allocation2 + $0x50] sm:$0xff] %v113
    %146 = vst [vmem:[#allocation2 + $0x58] sm:$0xff] %v114
    %147 = vst [vmem:[#allocation2 + $0x60] sm:$0xff] %v115
    %148 = vst [vmem:[#allocation2 + $0x68] sm:$0xff] %v116
    %149 = vst [vmem:[#allocation2 + $0x70] sm:$0xff] %v117
    %150 = vst [vmem:[#allocation2 + $0x78] sm:$0xff] %v118
    %151 = vst [vmem:[#allocation2 + $0x80] sm:$0xff] %v119
    %152 = vst [vmem:[#allocation2 + $0x88] sm:$0xff] %v120
    %153 = vst [vmem:[#allocation2 + $0x90] sm:$0xff] %v121
    %154 = vst [vmem:[#allocation2 + $0x98] sm:$0xff] %v122
    %155 = vst [vmem:[#allocation2 + $0xa0] sm:$0xff] %v123
    %156 = vst [vmem:[#allocation2 + $0xa8] sm:$0xff] %v124
    %157 = vst [vmem:[#allocation2 + $0xb0] sm:$0xff] %v125
    %158 = vst [vmem:[#allocation2 + $0xb8] sm:$0xff] %v126
    %159 = vst [vmem:[#allocation2 + $0xc0] sm:$0xff] %v127
    %160 = vst [vmem:[#allocation2 + $0xc8] sm:$0xff] %v128
    %161 = vst [vmem:[#allocation2 + $0xd0] sm:$0xff] %v129
    %162 = vst [vmem:[#allocation2 + $0xd8] sm:$0xff] %v130
    %163 = vst [vmem:[#allocation2 + $0xe0] sm:$0xff] %v131
    %164 = vst [vmem:[#allocation2 + $0xe8] sm:$0xff] %v132
    %165 = vst [vmem:[#allocation2 + $0xf0] sm:$0xff] %v133
    %166 = vst [vmem:[#allocation2 + $0xf8] sm:$0xff] %v134
    // Predicated region
    $region14: #{forward.5} parent=1 // pred_check
      _
    $region15: #{forward.5} parent=1 // pred_check_branch
      %168 = sbr.rel (0) target = $region17
    $region16: #{forward.5} parent=1 // pred_region
      %s170 = ssub.s32 4096, 4096
      %171 = vsyncadd [#allocation3], %s170
      %s172 = sshll.u32 [#allocation2], 4
      %s173 = int_to_ptr.vmem [resolvable:$true] %s172
      %178 = dma.vmem_to_hbm [thread:$0]  %s173, 4096, %s3, [#allocation3], 256, 256, 16
    $region17: #{forward.5} parent=1 // pred_fallthru
      _
    // Predicated region
    $region18: #{forward.5} parent=1 // pred_check
      _
    $region19: #{forward.5} parent=1 // pred_check_branch
      %180 = sbr.rel (0) target = $region21
    $region20: #{forward.5} parent=1 // pred_region
      %181 = dma.done [#allocation3], 4096
    $region21: #{forward.5} parent=1 // pred_fallthru
      _
    %182 = vsyncpa [#allocation3], 1

// kernel: forward.4
$region0: #{forward.4}
  #allocation0 [shape = 'u32[]', space=smem, size = 0x4, offset = 0x4, fixed_abs, tag = 'smem constant byte address 0x4 - core index']
  #allocation1 [shape = 'u32[144,128]{1,0:T(1,128)}', space=vmem, size = 0x12000, scoped, tag = 'internal scratch']
  %s0 = inlined_call_operand.vmem [shape: f32[128,512], index: 0, kind: input, shape index: {}]
  %s1 = inlined_call_operand.vmem [shape: f32[128,512], index: 1, kind: input, shape index: {}]
  %s2 = inlined_call_operand.vmem [shape: f32[1,512], index: 2, kind: input, shape index: {}]
  %s3 = inlined_call_operand.vmem [shape: f32[1,512], index: 3, kind: input, shape index: {}]
  %s4 = inlined_call_operand.vmem [shape: f32[512,256], index: 4, kind: input, shape index: {}]
  %s5 = inlined_call_operand.vmem [shape: f32[128,256], index: 5, kind: output, shape index: {0}]
  %s6 = inlined_call_operand.vmem [shape: f32[1,2,256], index: 6, kind: output, shape index: {1}]
  %7 = xla_tuple %s5, %s6
  %s8 = sld [smem:[#allocation0]]
  $region38: #{forward.4} parent=0
    _
  %s10 = ssub.s32 1, %s8
  %s11 = scalar_select 0, %s10, %s8
  // Predicated region
  $region2: #{forward.4} parent=0 // pred_check
    _
  $region3: #{forward.4} parent=0 // pred_check_branch
    %13 = sbr.rel (0) target = $region5
  $region4: #{forward.4} parent=0 // pred_region
    _
  $region5: #{forward.4} parent=0 // pred_fallthru
    _
  // Predicated region
  $region6: #{forward.4} parent=0 // pred_check
    _
  $region7: #{forward.4} parent=0 // pred_check_branch
    %15 = sbr.rel (0) target = $region9
  $region8: #{forward.4} parent=0 // pred_region
    _
  $region9: #{forward.4} parent=0 // pred_fallthru
    _
  // Predicated region
  $region10: #{forward.4} parent=0 // pred_check
    _
  $region11: #{forward.4} parent=0 // pred_check_branch
    %17 = sbr.rel (0) target = $region13
  $region12: #{forward.4} parent=0 // pred_region
    _
  $region13: #{forward.4} parent=0 // pred_fallthru
    _
  // Predicated region
  $region14: #{forward.4} parent=0 // pred_check
    _
  $region15: #{forward.4} parent=0 // pred_check_branch
    %19 = sbr.rel (0) target = $region17
  $region16: #{forward.4} parent=0 // pred_region
    _
  $region17: #{forward.4} parent=0 // pred_fallthru
    _
  // Predicated region
  $region18: #{forward.4} parent=0 // pred_check
    _
  $region19: #{forward.4} parent=0 // pred_check_branch
    %21 = sbr.rel (0) target = $region21
  $region20: #{forward.4} parent=0 // pred_region
    _
  $region21: #{forward.4} parent=0 // pred_fallthru
    _
  %v22 = vld [vmem:[%s0] sm:$0xff]
  %v23 = vld [vmem:[%s0 + $0x8] sm:$0xff]
  %v24 = vld [vmem:[%s0 + $0x10] sm:$0xff]
  %v25 = vld [vmem:[%s0 + $0x18] sm:$0xff]
  %v26 = vld [vmem:[%s0 + $0x20] sm:$0xff]
  %v27 = vld [vmem:[%s0 + $0x28] sm:$0xff]
  %v28 = vld [vmem:[%s0 + $0x30] sm:$0xff]
  %v29 = vld [vmem:[%s0 + $0x38] sm:$0xff]
  %v30 = vld [vmem:[%s0 + $0x40] sm:$0xff]
  %v31 = vld [vmem:[%s0 + $0x48] sm:$0xff]
  %v32 = vld [vmem:[%s0 + $0x50] sm:$0xff]
  %v33 = vld [vmem:[%s0 + $0x58] sm:$0xff]
  %v34 = vld [vmem:[%s0 + $0x60] sm:$0xff]
  %v35 = vld [vmem:[%s0 + $0x68] sm:$0xff]
  %v36 = vld [vmem:[%s0 + $0x70] sm:$0xff]
  %v37 = vld [vmem:[%s0 + $0x78] sm:$0xff]
  %v38 = vld [vmem:[%s0 + $0x80] sm:$0xff]
  %v39 = vld [vmem:[%s0 + $0x88] sm:$0xff]
  %v40 = vld [vmem:[%s0 + $0x90] sm:$0xff]
  %v41 = vld [vmem:[%s0 + $0x98] sm:$0xff]
  %v42 = vld [vmem:[%s0 + $0xa0] sm:$0xff]
  %v43 = vld [vmem:[%s0 + $0xa8] sm:$0xff]
  %v44 = vld [vmem:[%s0 + $0xb0] sm:$0xff]
  %v45 = vld [vmem:[%s0 + $0xb8] sm:$0xff]
  %v46 = vld [vmem:[%s0 + $0xc0] sm:$0xff]
  %v47 = vld [vmem:[%s0 + $0xc8] sm:$0xff]
  %v48 = vld [vmem:[%s0 + $0xd0] sm:$0xff]
  %v49 = vld [vmem:[%s0 + $0xd8] sm:$0xff]
  %v50 = vld [vmem:[%s0 + $0xe0] sm:$0xff]
  %v51 = vld [vmem:[%s0 + $0xe8] sm:$0xff]
  %v52 = vld [vmem:[%s0 + $0xf0] sm:$0xff]
  %v53 = vld [vmem:[%s0 + $0xf8] sm:$0xff]
  %v54 = vld [vmem:[%s0 + $0x100] sm:$0xff]
  %v55 = vld [vmem:[%s0 + $0x108] sm:$0xff]
  %v56 = vld [vmem:[%s0 + $0x110] sm:$0xff]
  %v57 = vld [vmem:[%s0 + $0x118] sm:$0xff]
  %v58 = vld [vmem:[%s0 + $0x120] sm:$0xff]
  %v59 = vld [vmem:[%s0 + $0x128] sm:$0xff]
  %v60 = vld [vmem:[%s0 + $0x130] sm:$0xff]
  %v61 = vld [vmem:[%s0 + $0x138] sm:$0xff]
  %v62 = vld [vmem:[%s0 + $0x140] sm:$0xff]
  %v63 = vld [vmem:[%s0 + $0x148] sm:$0xff]
  %v64 = vld [vmem:[%s0 + $0x150] sm:$0xff]
  %v65 = vld [vmem:[%s0 + $0x158] sm:$0xff]
  %v66 = vld [vmem:[%s0 + $0x160] sm:$0xff]
  %v67 = vld [vmem:[%s0 + $0x168] sm:$0xff]
  %v68 = vld [vmem:[%s0 + $0x170] sm:$0xff]
  %v69 = vld [vmem:[%s0 + $0x178] sm:$0xff]
  %v70 = vld [vmem:[%s0 + $0x180] sm:$0xff]
  %v71 = vld [vmem:[%s0 + $0x188] sm:$0xff]
  %v72 = vld [vmem:[%s0 + $0x190] sm:$0xff]
  %v73 = vld [vmem:[%s0 + $0x198] sm:$0xff]
  %v74 = vld [vmem:[%s0 + $0x1a0] sm:$0xff]
  %v75 = vld [vmem:[%s0 + $0x1a8] sm:$0xff]
  %v76 = vld [vmem:[%s0 + $0x1b0] sm:$0xff]
  %v77 = vld [vmem:[%s0 + $0x1b8] sm:$0xff]
  %v78 = vld [vmem:[%s0 + $0x1c0] sm:$0xff]
  %v79 = vld [vmem:[%s0 + $0x1c8] sm:$0xff]
  %v80 = vld [vmem:[%s0 + $0x1d0] sm:$0xff]
  %v81 = vld [vmem:[%s0 + $0x1d8] sm:$0xff]
  %v82 = vld [vmem:[%s0 + $0x1e0] sm:$0xff]
  %v83 = vld [vmem:[%s0 + $0x1e8] sm:$0xff]
  %v84 = vld [vmem:[%s0 + $0x1f0] sm:$0xff]
  %v85 = vld [vmem:[%s0 + $0x1f8] sm:$0xff]
  %v86 = vld [vmem:[%s2] sm:$0xf]
  %v88 = vlaneseq
  %v89 = vshrl.u32 %v88, 7
  %v90 = vsub.s32 0, %v89
  %v91 = vrot.slane %v86, %v90
  %v92 = vlaneseq
  %v93 = vshrl.u32 %v92, 7
  %v94 = vsub.s32 1, %v93
  %v95 = vrot.slane %v86, %v94
  %v96 = vlaneseq
  %v97 = vshrl.u32 %v96, 7
  %v98 = vsub.s32 2, %v97
  %v99 = vrot.slane %v86, %v98
  %v100 = vlaneseq
  %v101 = vshrl.u32 %v100, 7
  %v102 = vsub.s32 3, %v101
  %v103 = vrot.slane %v86, %v102
  %v108 = vmul.f32 %v22, %v91
  %v109 = vmul.f32 %v23, %v95
  %v110 = vmul.f32 %v24, %v99
  %v111 = vmul.f32 %v25, %v103
  %v112 = vmul.f32 %v26, %v91
  %v113 = vmul.f32 %v27, %v95
  %v114 = vmul.f32 %v28, %v99
  %v115 = vmul.f32 %v29, %v103
  %v116 = vmul.f32 %v30, %v91
  %v117 = vmul.f32 %v31, %v95
  %v118 = vmul.f32 %v32, %v99
  %v119 = vmul.f32 %v33, %v103
  %v120 = vmul.f32 %v34, %v91
  %v121 = vmul.f32 %v35, %v95
  %v122 = vmul.f32 %v36, %v99
  %v123 = vmul.f32 %v37, %v103
  %v124 = vmul.f32 %v38, %v91
  %v125 = vmul.f32 %v39, %v95
  %v126 = vmul.f32 %v40, %v99
  %v127 = vmul.f32 %v41, %v103
  %v128 = vmul.f32 %v42, %v91
  %v129 = vmul.f32 %v43, %v95
  %v130 = vmul.f32 %v44, %v99
  %v131 = vmul.f32 %v45, %v103
  %v132 = vmul.f32 %v46, %v91
  %v133 = vmul.f32 %v47, %v95
  %v134 = vmul.f32 %v48, %v99
  %v135 = vmul.f32 %v49, %v103
  %v136 = vmul.f32 %v50, %v91
  %v137 = vmul.f32 %v51, %v95
  %v138 = vmul.f32 %v52, %v99
  %v139 = vmul.f32 %v53, %v103
  %v140 = vmul.f32 %v54, %v91
  %v141 = vmul.f32 %v55, %v95
  %v142 = vmul.f32 %v56, %v99
  %v143 = vmul.f32 %v57, %v103
  %v144 = vmul.f32 %v58, %v91
  %v145 = vmul.f32 %v59, %v95
  %v146 = vmul.f32 %v60, %v99
  %v147 = vmul.f32 %v61, %v103
  %v148 = vmul.f32 %v62, %v91
  %v149 = vmul.f32 %v63, %v95
  %v150 = vmul.f32 %v64, %v99
  %v151 = vmul.f32 %v65, %v103
  %v152 = vmul.f32 %v66, %v91
  %v153 = vmul.f32 %v67, %v95
  %v154 = vmul.f32 %v68, %v99
  %v155 = vmul.f32 %v69, %v103
  %v156 = vmul.f32 %v70, %v91
  %v157 = vmul.f32 %v71, %v95
  %v158 = vmul.f32 %v72, %v99
  %v159 = vmul.f32 %v73, %v103
  %v160 = vmul.f32 %v74, %v91
  %v161 = vmul.f32 %v75, %v95
  %v162 = vmul.f32 %v76, %v99
  %v163 = vmul.f32 %v77, %v103
  %v164 = vmul.f32 %v78, %v91
  %v165 = vmul.f32 %v79, %v95
  %v166 = vmul.f32 %v80, %v99
  %v167 = vmul.f32 %v81, %v103
  %v168 = vmul.f32 %v82, %v91
  %v169 = vmul.f32 %v83, %v95
  %v170 = vmul.f32 %v84, %v99
  %v171 = vmul.f32 %v85, %v103
  %v172 = vld [vmem:[%s3] sm:$0xf]
  %v174 = vlaneseq
  %v175 = vshrl.u32 %v174, 7
  %v176 = vsub.s32 0, %v175
  %v177 = vrot.slane %v172, %v176
  %v178 = vlaneseq
  %v179 = vshrl.u32 %v178, 7
  %v180 = vsub.s32 1, %v179
  %v181 = vrot.slane %v172, %v180
  %v182 = vlaneseq
  %v183 = vshrl.u32 %v182, 7
  %v184 = vsub.s32 2, %v183
  %v185 = vrot.slane %v172, %v184
  %v186 = vlaneseq
  %v187 = vshrl.u32 %v186, 7
  %v188 = vsub.s32 3, %v187
  %v189 = vrot.slane %v172, %v188
  %v194 = vadd.f32 %v108, %v177
  %v195 = vadd.f32 %v109, %v181
  %v196 = vadd.f32 %v110, %v185
  %v197 = vadd.f32 %v111, %v189
  %v198 = vadd.f32 %v112, %v177
  %v199 = vadd.f32 %v113, %v181
  %v200 = vadd.f32 %v114, %v185
  %v201 = vadd.f32 %v115, %v189
  %v202 = vadd.f32 %v116, %v177
  %v203 = vadd.f32 %v117, %v181
  %v204 = vadd.f32 %v118, %v185
  %v205 = vadd.f32 %v119, %v189
  %v206 = vadd.f32 %v120, %v177
  %v207 = vadd.f32 %v121, %v181
  %v208 = vadd.f32 %v122, %v185
  %v209 = vadd.f32 %v123, %v189
  %v210 = vadd.f32 %v124, %v177
  %v211 = vadd.f32 %v125, %v181
  %v212 = vadd.f32 %v126, %v185
  %v213 = vadd.f32 %v127, %v189
  %v214 = vadd.f32 %v128, %v177
  %v215 = vadd.f32 %v129, %v181
  %v216 = vadd.f32 %v130, %v185
  %v217 = vadd.f32 %v131, %v189
  %v218 = vadd.f32 %v132, %v177
  %v219 = vadd.f32 %v133, %v181
  %v220 = vadd.f32 %v134, %v185
  %v221 = vadd.f32 %v135, %v189
  %v222 = vadd.f32 %v136, %v177
  %v223 = vadd.f32 %v137, %v181
  %v224 = vadd.f32 %v138, %v185
  %v225 = vadd.f32 %v139, %v189
  %v226 = vadd.f32 %v140, %v177
  %v227 = vadd.f32 %v141, %v181
  %v228 = vadd.f32 %v142, %v185
  %v229 = vadd.f32 %v143, %v189
  %v230 = vadd.f32 %v144, %v177
  %v231 = vadd.f32 %v145, %v181
  %v232 = vadd.f32 %v146, %v185
  %v233 = vadd.f32 %v147, %v189
  %v234 = vadd.f32 %v148, %v177
  %v235 = vadd.f32 %v149, %v181
  %v236 = vadd.f32 %v150, %v185
  %v237 = vadd.f32 %v151, %v189
  %v238 = vadd.f32 %v152, %v177
  %v239 = vadd.f32 %v153, %v181
  %v240 = vadd.f32 %v154, %v185
  %v241 = vadd.f32 %v155, %v189
  %v242 = vadd.f32 %v156, %v177
  %v243 = vadd.f32 %v157, %v181
  %v244 = vadd.f32 %v158, %v185
  %v245 = vadd.f32 %v159, %v189
  %v246 = vadd.f32 %v160, %v177
  %v247 = vadd.f32 %v161, %v181
  %v248 = vadd.f32 %v162, %v185
  %v249 = vadd.f32 %v163, %v189
  %v250 = vadd.f32 %v164, %v177
  %v251 = vadd.f32 %v165, %v181
  %v252 = vadd.f32 %v166, %v185
  %v253 = vadd.f32 %v167, %v189
  %v254 = vadd.f32 %v168, %v177
  %v255 = vadd.f32 %v169, %v181
  %v256 = vadd.f32 %v170, %v185
  %v257 = vadd.f32 %v171, %v189
  %v258 = vld [vmem:[%s1] sm:$0xff]
  %v259 = vld [vmem:[%s1 + $0x8] sm:$0xff]
  %v260 = vld [vmem:[%s1 + $0x10] sm:$0xff]
  %v261 = vld [vmem:[%s1 + $0x18] sm:$0xff]
  %v262 = vld [vmem:[%s1 + $0x20] sm:$0xff]
  %v263 = vld [vmem:[%s1 + $0x28] sm:$0xff]
  %v264 = vld [vmem:[%s1 + $0x30] sm:$0xff]
  %v265 = vld [vmem:[%s1 + $0x38] sm:$0xff]
  %v266 = vld [vmem:[%s1 + $0x40] sm:$0xff]
  %v267 = vld [vmem:[%s1 + $0x48] sm:$0xff]
  %v268 = vld [vmem:[%s1 + $0x50] sm:$0xff]
  %v269 = vld [vmem:[%s1 + $0x58] sm:$0xff]
  %v270 = vld [vmem:[%s1 + $0x60] sm:$0xff]
  %v271 = vld [vmem:[%s1 + $0x68] sm:$0xff]
  %v272 = vld [vmem:[%s1 + $0x70] sm:$0xff]
  %v273 = vld [vmem:[%s1 + $0x78] sm:$0xff]
  %v274 = vld [vmem:[%s1 + $0x80] sm:$0xff]
  %v275 = vld [vmem:[%s1 + $0x88] sm:$0xff]
  %v276 = vld [vmem:[%s1 + $0x90] sm:$0xff]
  %v277 = vld [vmem:[%s1 + $0x98] sm:$0xff]
  %v278 = vld [vmem:[%s1 + $0xa0] sm:$0xff]
  %v279 = vld [vmem:[%s1 + $0xa8] sm:$0xff]
  %v280 = vld [vmem:[%s1 + $0xb0] sm:$0xff]
  %v281 = vld [vmem:[%s1 + $0xb8] sm:$0xff]
  %v282 = vld [vmem:[%s1 + $0xc0] sm:$0xff]
  %v283 = vld [vmem:[%s1 + $0xc8] sm:$0xff]
  %v284 = vld [vmem:[%s1 + $0xd0] sm:$0xff]
  %v285 = vld [vmem:[%s1 + $0xd8] sm:$0xff]
  %v286 = vld [vmem:[%s1 + $0xe0] sm:$0xff]
  %v287 = vld [vmem:[%s1 + $0xe8] sm:$0xff]
  %v288 = vld [vmem:[%s1 + $0xf0] sm:$0xff]
  %v289 = vld [vmem:[%s1 + $0xf8] sm:$0xff]
  %v290 = vld [vmem:[%s1 + $0x100] sm:$0xff]
  %v291 = vld [vmem:[%s1 + $0x108] sm:$0xff]
  %v292 = vld [vmem:[%s1 + $0x110] sm:$0xff]
  %v293 = vld [vmem:[%s1 + $0x118] sm:$0xff]
  %v294 = vld [vmem:[%s1 + $0x120] sm:$0xff]
  %v295 = vld [vmem:[%s1 + $0x128] sm:$0xff]
  %v296 = vld [vmem:[%s1 + $0x130] sm:$0xff]
  %v297 = vld [vmem:[%s1 + $0x138] sm:$0xff]
  %v298 = vld [vmem:[%s1 + $0x140] sm:$0xff]
  %v299 = vld [vmem:[%s1 + $0x148] sm:$0xff]
  %v300 = vld [vmem:[%s1 + $0x150] sm:$0xff]
  %v301 = vld [vmem:[%s1 + $0x158] sm:$0xff]
  %v302 = vld [vmem:[%s1 + $0x160] sm:$0xff]
  %v303 = vld [vmem:[%s1 + $0x168] sm:$0xff]
  %v304 = vld [vmem:[%s1 + $0x170] sm:$0xff]
  %v305 = vld [vmem:[%s1 + $0x178] sm:$0xff]
  %v306 = vld [vmem:[%s1 + $0x180] sm:$0xff]
  %v307 = vld [vmem:[%s1 + $0x188] sm:$0xff]
  %v308 = vld [vmem:[%s1 + $0x190] sm:$0xff]
  %v309 = vld [vmem:[%s1 + $0x198] sm:$0xff]
  %v310 = vld [vmem:[%s1 + $0x1a0] sm:$0xff]
  %v311 = vld [vmem:[%s1 + $0x1a8] sm:$0xff]
  %v312 = vld [vmem:[%s1 + $0x1b0] sm:$0xff]
  %v313 = vld [vmem:[%s1 + $0x1b8] sm:$0xff]
  %v314 = vld [vmem:[%s1 + $0x1c0] sm:$0xff]
  %v315 = vld [vmem:[%s1 + $0x1c8] sm:$0xff]
  %v316 = vld [vmem:[%s1 + $0x1d0] sm:$0xff]
  %v317 = vld [vmem:[%s1 + $0x1d8] sm:$0xff]
  %v318 = vld [vmem:[%s1 + $0x1e0] sm:$0xff]
  %v319 = vld [vmem:[%s1 + $0x1e8] sm:$0xff]
  %v320 = vld [vmem:[%s1 + $0x1f0] sm:$0xff]
  %v321 = vld [vmem:[%s1 + $0x1f8] sm:$0xff]
  %v322 = vadd.f32 %v194, %v258
  %v323 = vadd.f32 %v195, %v259
  %v324 = vadd.f32 %v196, %v260
  %v325 = vadd.f32 %v197, %v261
  %v326 = vadd.f32 %v198, %v262
  %v327 = vadd.f32 %v199, %v263
  %v328 = vadd.f32 %v200, %v264
  %v329 = vadd.f32 %v201, %v265
  %v330 = vadd.f32 %v202, %v266
  %v331 = vadd.f32 %v203, %v267
  %v332 = vadd.f32 %v204, %v268
  %v333 = vadd.f32 %v205, %v269
  %v334 = vadd.f32 %v206, %v270
  %v335 = vadd.f32 %v207, %v271
  %v336 = vadd.f32 %v208, %v272
  %v337 = vadd.f32 %v209, %v273
  %v338 = vadd.f32 %v210, %v274
  %v339 = vadd.f32 %v211, %v275
  %v340 = vadd.f32 %v212, %v276
  %v341 = vadd.f32 %v213, %v277
  %v342 = vadd.f32 %v214, %v278
  %v343 = vadd.f32 %v215, %v279
  %v344 = vadd.f32 %v216, %v280
  %v345 = vadd.f32 %v217, %v281
  %v346 = vadd.f32 %v218, %v282
  %v347 = vadd.f32 %v219, %v283
  %v348 = vadd.f32 %v220, %v284
  %v349 = vadd.f32 %v221, %v285
  %v350 = vadd.f32 %v222, %v286
  %v351 = vadd.f32 %v223, %v287
  %v352 = vadd.f32 %v224, %v288
  %v353 = vadd.f32 %v225, %v289
  %v354 = vadd.f32 %v226, %v290
  %v355 = vadd.f32 %v227, %v291
  %v356 = vadd.f32 %v228, %v292
  %v357 = vadd.f32 %v229, %v293
  %v358 = vadd.f32 %v230, %v294
  %v359 = vadd.f32 %v231, %v295
  %v360 = vadd.f32 %v232, %v296
  %v361 = vadd.f32 %v233, %v297
  %v362 = vadd.f32 %v234, %v298
  %v363 = vadd.f32 %v235, %v299
  %v364 = vadd.f32 %v236, %v300
  %v365 = vadd.f32 %v237, %v301
  %v366 = vadd.f32 %v238, %v302
  %v367 = vadd.f32 %v239, %v303
  %v368 = vadd.f32 %v240, %v304
  %v369 = vadd.f32 %v241, %v305
  %v370 = vadd.f32 %v242, %v306
  %v371 = vadd.f32 %v243, %v307
  %v372 = vadd.f32 %v244, %v308
  %v373 = vadd.f32 %v245, %v309
  %v374 = vadd.f32 %v246, %v310
  %v375 = vadd.f32 %v247, %v311
  %v376 = vadd.f32 %v248, %v312
  %v377 = vadd.f32 %v249, %v313
  %v378 = vadd.f32 %v250, %v314
  %v379 = vadd.f32 %v251, %v315
  %v380 = vadd.f32 %v252, %v316
  %v381 = vadd.f32 %v253, %v317
  %v382 = vadd.f32 %v254, %v318
  %v383 = vadd.f32 %v255, %v319
  %v384 = vadd.f32 %v256, %v320
  %v385 = vadd.f32 %v257, %v321
  %v386 = vmax.f32 %v322, 0.0
  %v387 = vmax.f32 %v323, 0.0
  %v388 = vmax.f32 %v324, 0.0
  %v389 = vmax.f32 %v325, 0.0
  %v390 = vmax.f32 %v326, 0.0
  %v391 = vmax.f32 %v327, 0.0
  %v392 = vmax.f32 %v328, 0.0
  %v393 = vmax.f32 %v329, 0.0
  %v394 = vmax.f32 %v330, 0.0
  %v395 = vmax.f32 %v331, 0.0
  %v396 = vmax.f32 %v332, 0.0
  %v397 = vmax.f32 %v333, 0.0
  %v398 = vmax.f32 %v334, 0.0
  %v399 = vmax.f32 %v335, 0.0
  %v400 = vmax.f32 %v336, 0.0
  %v401 = vmax.f32 %v337, 0.0
  %v402 = vmax.f32 %v338, 0.0
  %v403 = vmax.f32 %v339, 0.0
  %v404 = vmax.f32 %v340, 0.0
  %v405 = vmax.f32 %v341, 0.0
  %v406 = vmax.f32 %v342, 0.0
  %v407 = vmax.f32 %v343, 0.0
  %v408 = vmax.f32 %v344, 0.0
  %v409 = vmax.f32 %v345, 0.0
  %v410 = vmax.f32 %v346, 0.0
  %v411 = vmax.f32 %v347, 0.0
  %v412 = vmax.f32 %v348, 0.0
  %v413 = vmax.f32 %v349, 0.0
  %v414 = vmax.f32 %v350, 0.0
  %v415 = vmax.f32 %v351, 0.0
  %v416 = vmax.f32 %v352, 0.0
  %v417 = vmax.f32 %v353, 0.0
  %v418 = vmax.f32 %v354, 0.0
  %v419 = vmax.f32 %v355, 0.0
  %v420 = vmax.f32 %v356, 0.0
  %v421 = vmax.f32 %v357, 0.0
  %v422 = vmax.f32 %v358, 0.0
  %v423 = vmax.f32 %v359, 0.0
  %v424 = vmax.f32 %v360, 0.0
  %v425 = vmax.f32 %v361, 0.0
  %v426 = vmax.f32 %v362, 0.0
  %v427 = vmax.f32 %v363, 0.0
  %v428 = vmax.f32 %v364, 0.0
  %v429 = vmax.f32 %v365, 0.0
  %v430 = vmax.f32 %v366, 0.0
  %v431 = vmax.f32 %v367, 0.0
  %v432 = vmax.f32 %v368, 0.0
  %v433 = vmax.f32 %v369, 0.0
  %v434 = vmax.f32 %v370, 0.0
  %v435 = vmax.f32 %v371, 0.0
  %v436 = vmax.f32 %v372, 0.0
  %v437 = vmax.f32 %v373, 0.0
  %v438 = vmax.f32 %v374, 0.0
  %v439 = vmax.f32 %v375, 0.0
  %v440 = vmax.f32 %v376, 0.0
  %v441 = vmax.f32 %v377, 0.0
  %v442 = vmax.f32 %v378, 0.0
  %v443 = vmax.f32 %v379, 0.0
  %v444 = vmax.f32 %v380, 0.0
  %v445 = vmax.f32 %v381, 0.0
  %v446 = vmax.f32 %v382, 0.0
  %v447 = vmax.f32 %v383, 0.0
  %v448 = vmax.f32 %v384, 0.0
  %v449 = vmax.f32 %v385, 0.0
  %v450 = vld [vmem:[%s4] sm:$0xff]
  %v451 = vld [vmem:[%s4 + $0x8] sm:$0xff]
  %v452 = vld [vmem:[%s4 + $0x10] sm:$0xff]
  %v453 = vld [vmem:[%s4 + $0x18] sm:$0xff]
  %v454 = vld [vmem:[%s4 + $0x20] sm:$0xff]
  %v455 = vld [vmem:[%s4 + $0x28] sm:$0xff]
  %v456 = vld [vmem:[%s4 + $0x30] sm:$0xff]
  %v457 = vld [vmem:[%s4 + $0x38] sm:$0xff]
  %v458 = vld [vmem:[%s4 + $0x40] sm:$0xff]
  %v459 = vld [vmem:[%s4 + $0x48] sm:$0xff]
  %v460 = vld [vmem:[%s4 + $0x50] sm:$0xff]
  %v461 = vld [vmem:[%s4 + $0x58] sm:$0xff]
  %v462 = vld [vmem:[%s4 + $0x60] sm:$0xff]
  %v463 = vld [vmem:[%s4 + $0x68] sm:$0xff]
  %v464 = vld [vmem:[%s4 + $0x70] sm:$0xff]
  %v465 = vld [vmem:[%s4 + $0x78] sm:$0xff]
  %v466 = vld [vmem:[%s4 + $0x80] sm:$0xff]
  %v467 = vld [vmem:[%s4 + $0x88] sm:$0xff]
  %v468 = vld [vmem:[%s4 + $0x90] sm:$0xff]
  %v469 = vld [vmem:[%s4 + $0x98] sm:$0xff]
  %v470 = vld [vmem:[%s4 + $0xa0] sm:$0xff]
  %v471 = vld [vmem:[%s4 + $0xa8] sm:$0xff]
  %v472 = vld [vmem:[%s4 + $0xb0] sm:$0xff]
  %v473 = vld [vmem:[%s4 + $0xb8] sm:$0xff]
  %v474 = vld [vmem:[%s4 + $0xc0] sm:$0xff]
  %v475 = vld [vmem:[%s4 + $0xc8] sm:$0xff]
  %v476 = vld [vmem:[%s4 + $0xd0] sm:$0xff]
  %v477 = vld [vmem:[%s4 + $0xd8] sm:$0xff]
  %v478 = vld [vmem:[%s4 + $0xe0] sm:$0xff]
  %v479 = vld [vmem:[%s4 + $0xe8] sm:$0xff]
  %v480 = vld [vmem:[%s4 + $0xf0] sm:$0xff]
  %v481 = vld [vmem:[%s4 + $0xf8] sm:$0xff]
  %v482 = vld [vmem:[%s4 + $0x100] sm:$0xff]
  %v483 = vld [vmem:[%s4 + $0x108] sm:$0xff]
  %v484 = vld [vmem:[%s4 + $0x110] sm:$0xff]
  %v485 = vld [vmem:[%s4 + $0x118] sm:$0xff]
  %v486 = vld [vmem:[%s4 + $0x120] sm:$0xff]
  %v487 = vld [vmem:[%s4 + $0x128] sm:$0xff]
  %v488 = vld [vmem:[%s4 + $0x130] sm:$0xff]
  %v489 = vld [vmem:[%s4 + $0x138] sm:$0xff]
  %v490 = vld [vmem:[%s4 + $0x140] sm:$0xff]
  %v491 = vld [vmem:[%s4 + $0x148] sm:$0xff]
  %v492 = vld [vmem:[%s4 + $0x150] sm:$0xff]
  %v493 = vld [vmem:[%s4 + $0x158] sm:$0xff]
  %v494 = vld [vmem:[%s4 + $0x160] sm:$0xff]
  %v495 = vld [vmem:[%s4 + $0x168] sm:$0xff]
  %v496 = vld [vmem:[%s4 + $0x170] sm:$0xff]
  %v497 = vld [vmem:[%s4 + $0x178] sm:$0xff]
  %v498 = vld [vmem:[%s4 + $0x180] sm:$0xff]
  %v499 = vld [vmem:[%s4 + $0x188] sm:$0xff]
  %v500 = vld [vmem:[%s4 + $0x190] sm:$0xff]
  %v501 = vld [vmem:[%s4 + $0x198] sm:$0xff]
  %v502 = vld [vmem:[%s4 + $0x1a0] sm:$0xff]
  %v503 = vld [vmem:[%s4 + $0x1a8] sm:$0xff]
  %v504 = vld [vmem:[%s4 + $0x1b0] sm:$0xff]
  %v505 = vld [vmem:[%s4 + $0x1b8] sm:$0xff]
  %v506 = vld [vmem:[%s4 + $0x1c0] sm:$0xff]
  %v507 = vld [vmem:[%s4 + $0x1c8] sm:$0xff]
  %v508 = vld [vmem:[%s4 + $0x1d0] sm:$0xff]
  %v509 = vld [vmem:[%s4 + $0x1d8] sm:$0xff]
  %v510 = vld [vmem:[%s4 + $0x1e0] sm:$0xff]
  %v511 = vld [vmem:[%s4 + $0x1e8] sm:$0xff]
  %v512 = vld [vmem:[%s4 + $0x1f0] sm:$0xff]
  %v513 = vld [vmem:[%s4 + $0x1f8] sm:$0xff]
  %v514 = vld [vmem:[%s4 + $0x200] sm:$0xff]
  %v515 = vld [vmem:[%s4 + $0x208] sm:$0xff]
  %v516 = vld [vmem:[%s4 + $0x210] sm:$0xff]
  %v517 = vld [vmem:[%s4 + $0x218] sm:$0xff]
  %v518 = vld [vmem:[%s4 + $0x220] sm:$0xff]
  %v519 = vld [vmem:[%s4 + $0x228] sm:$0xff]
  %v520 = vld [vmem:[%s4 + $0x230] sm:$0xff]
  %v521 = vld [vmem:[%s4 + $0x238] sm:$0xff]
  %v522 = vld [vmem:[%s4 + $0x240] sm:$0xff]
  %v523 = vld [vmem:[%s4 + $0x248] sm:$0xff]
  %v524 = vld [vmem:[%s4 + $0x250] sm:$0xff]
  %v525 = vld [vmem:[%s4 + $0x258] sm:$0xff]
  %v526 = vld [vmem:[%s4 + $0x260] sm:$0xff]
  %v527 = vld [vmem:[%s4 + $0x268] sm:$0xff]
  %v528 = vld [vmem:[%s4 + $0x270] sm:$0xff]
  %v529 = vld [vmem:[%s4 + $0x278] sm:$0xff]
  %v530 = vld [vmem:[%s4 + $0x280] sm:$0xff]
  %v531 = vld [vmem:[%s4 + $0x288] sm:$0xff]
  %v532 = vld [vmem:[%s4 + $0x290] sm:$0xff]
  %v533 = vld [vmem:[%s4 + $0x298] sm:$0xff]
  %v534 = vld [vmem:[%s4 + $0x2a0] sm:$0xff]
  %v535 = vld [vmem:[%s4 + $0x2a8] sm:$0xff]
  %v536 = vld [vmem:[%s4 + $0x2b0] sm:$0xff]
  %v537 = vld [vmem:[%s4 + $0x2b8] sm:$0xff]
  %v538 = vld [vmem:[%s4 + $0x2c0] sm:$0xff]
  %v539 = vld [vmem:[%s4 + $0x2c8] sm:$0xff]
  %v540 = vld [vmem:[%s4 + $0x2d0] sm:$0xff]
  %v541 = vld [vmem:[%s4 + $0x2d8] sm:$0xff]
  %v542 = vld [vmem:[%s4 + $0x2e0] sm:$0xff]
  %v543 = vld [vmem:[%s4 + $0x2e8] sm:$0xff]
  %v544 = vld [vmem:[%s4 + $0x2f0] sm:$0xff]
  %v545 = vld [vmem:[%s4 + $0x2f8] sm:$0xff]
  %v546 = vld [vmem:[%s4 + $0x300] sm:$0xff]
  %v547 = vld [vmem:[%s4 + $0x308] sm:$0xff]
  %v548 = vld [vmem:[%s4 + $0x310] sm:$0xff]
  %v549 = vld [vmem:[%s4 + $0x318] sm:$0xff]
  %v550 = vld [vmem:[%s4 + $0x320] sm:$0xff]
  %v551 = vld [vmem:[%s4 + $0x328] sm:$0xff]
  %v552 = vld [vmem:[%s4 + $0x330] sm:$0xff]
  %v553 = vld [vmem:[%s4 + $0x338] sm:$0xff]
  %v554 = vld [vmem:[%s4 + $0x340] sm:$0xff]
  %v555 = vld [vmem:[%s4 + $0x348] sm:$0xff]
  %v556 = vld [vmem:[%s4 + $0x350] sm:$0xff]
  %v557 = vld [vmem:[%s4 + $0x358] sm:$0xff]
  %v558 = vld [vmem:[%s4 + $0x360] sm:$0xff]
  %v559 = vld [vmem:[%s4 + $0x368] sm:$0xff]
  %v560 = vld [vmem:[%s4 + $0x370] sm:$0xff]
  %v561 = vld [vmem:[%s4 + $0x378] sm:$0xff]
  %v562 = vld [vmem:[%s4 + $0x380] sm:$0xff]
  %v563 = vld [vmem:[%s4 + $0x388] sm:$0xff]
  %v564 = vld [vmem:[%s4 + $0x390] sm:$0xff]
  %v565 = vld [vmem:[%s4 + $0x398] sm:$0xff]
  %v566 = vld [vmem:[%s4 + $0x3a0] sm:$0xff]
  %v567 = vld [vmem:[%s4 + $0x3a8] sm:$0xff]
  %v568 = vld [vmem:[%s4 + $0x3b0] sm:$0xff]
  %v569 = vld [vmem:[%s4 + $0x3b8] sm:$0xff]
  %v570 = vld [vmem:[%s4 + $0x3c0] sm:$0xff]
  %v571 = vld [vmem:[%s4 + $0x3c8] sm:$0xff]
  %v572 = vld [vmem:[%s4 + $0x3d0] sm:$0xff]
  %v573 = vld [vmem:[%s4 + $0x3d8] sm:$0xff]
  %v574 = vld [vmem:[%s4 + $0x3e0] sm:$0xff]
  %v575 = vld [vmem:[%s4 + $0x3e8] sm:$0xff]
  %v576 = vld [vmem:[%s4 + $0x3f0] sm:$0xff]
  %v577 = vld [vmem:[%s4 + $0x3f8] sm:$0xff]
  %578 = vmatprep.subr.mxu0 %v451
  %579 = vmatpush1.msra.mxu0 %v450
  %580 = vmatprep.subr.mxu0 %v453
  %581 = vmatpush1.msra.mxu0 %v452
  %582 = vmatprep.subr.mxu0 %v455
  %583 = vmatpush1.msra.mxu0 %v454
  %584 = vmatprep.subr.mxu0 %v457
  %585 = vmatpush1.msra.mxu0 %v456
  %586 = vmatprep.subr.mxu0 %v459
  %587 = vmatpush1.msra.mxu0 %v458
  %588 = vmatprep.subr.mxu0 %v461
  %589 = vmatpush1.msra.mxu0 %v460
  %590 = vmatprep.subr.mxu0 %v463
  %591 = vmatpush1.msra.mxu0 %v462
  %592 = vmatprep.subr.mxu0 %v465
  %593 = vmatpush1.msra.mxu0 %v464
  %594 = vmatprep.subr.mxu0 %v467
  %595 = vmatpush1.msra.mxu0 %v466
  %596 = vmatprep.subr.mxu0 %v469
  %597 = vmatpush1.msra.mxu0 %v468
  %598 = vmatprep.subr.mxu0 %v471
  %599 = vmatpush1.msra.mxu0 %v470
  %600 = vmatprep.subr.mxu0 %v473
  %601 = vmatpush1.msra.mxu0 %v472
  %602 = vmatprep.subr.mxu0 %v475
  %603 = vmatpush1.msra.mxu0 %v474
  %604 = vmatprep.subr.mxu0 %v477
  %605 = vmatpush1.msra.mxu0 %v476
  %606 = vmatprep.subr.mxu0 %v479
  %607 = vmatpush1.msra.mxu0 %v478
  %608 = vmatprep.subr.mxu0 %v481
  %609 = vmatpush1.msra.mxu0 %v480
  %610 = vmatprep.subr.mxu0 %v483
  %611 = vmatpush1.msra.mxu0 %v482
  %612 = vmatprep.subr.mxu0 %v485
  %613 = vmatpush1.msra.mxu0 %v484
  %614 = vmatprep.subr.mxu0 %v487
  %615 = vmatpush1.msra.mxu0 %v486
  %616 = vmatprep.subr.mxu0 %v489
  %617 = vmatpush1.msra.mxu0 %v488
  %618 = vmatprep.subr.mxu0 %v491
  %619 = vmatpush1.msra.mxu0 %v490
  %620 = vmatprep.subr.mxu0 %v493
  %621 = vmatpush1.msra.mxu0 %v492
  %622 = vmatprep.subr.mxu0 %v495
  %623 = vmatpush1.msra.mxu0 %v494
  %624 = vmatprep.subr.mxu0 %v497
  %625 = vmatpush1.msra.mxu0 %v496
  %626 = vmatprep.subr.mxu0 %v499
  %627 = vmatpush1.msra.mxu0 %v498
  %628 = vmatprep.subr.mxu0 %v501
  %629 = vmatpush1.msra.mxu0 %v500
  %630 = vmatprep.subr.mxu0 %v503
  %631 = vmatpush1.msra.mxu0 %v502
  %632 = vmatprep.subr.mxu0 %v505
  %633 = vmatpush1.msra.mxu0 %v504
  %634 = vmatprep.subr.mxu0 %v507
  %635 = vmatpush1.msra.mxu0 %v506
  %636 = vmatprep.subr.mxu0 %v509
  %637 = vmatpush1.msra.mxu0 %v508
  %638 = vmatprep.subr.mxu0 %v511
  %639 = vmatpush1.msra.mxu0 %v510
  %640 = vmatprep.subr.mxu0 %v513
  %641 = vmatpush1.msra.mxu0 %v512
  %642 = vmatprep.mubr.f32.mxu0 %v387
  %643 = vmatmul.mubr.f32.gmra.mrb[0].mxu0 %v386
  %v644 = vpop.f32.mrb[0].mxu0
  %v645 = vadd.f32 0.0, %v644
  %v646 = vpop.f32.mrb[0].mxu0
  %v647 = vadd.f32 0.0, %v646
  %648 = vmatprep.mubr.f32.mxu0 %v391
  %649 = vmatmul.mubr.f32.gmra.mrb[0].mxu0 %v390
  %v650 = vpop.f32.mrb[0].mxu0
  %v651 = vadd.f32 0.0, %v650
  %v652 = vpop.f32.mrb[0].mxu0
  %v653 = vadd.f32 0.0, %v652
  %654 = vmatprep.mubr.f32.mxu0 %v395
  %655 = vmatmul.mubr.f32.gmra.mrb[0].mxu0 %v394
  %v656 = vpop.f32.mrb[0].mxu0
  %v657 = vadd.f32 0.0, %v656
  %v658 = vpop.f32.mrb[0].mxu0
  %v659 = vadd.f32 0.0, %v658
  %660 = vmatprep.mubr.f32.mxu0 %v399
  %661 = vmatmul.mubr.f32.gmra.mrb[0].mxu0 %v398
  %v662 = vpop.f32.mrb[0].mxu0
  %v663 = vadd.f32 0.0, %v662
  %v664 = vpop.f32.mrb[0].mxu0
  %v665 = vadd.f32 0.0, %v664
  %666 = vmatprep.mubr.f32.mxu0 %v403
  %667 = vmatmul.mubr.f32.gmra.mrb[0].mxu0 %v402
  %v668 = vpop.f32.mrb[0].mxu0
  %v669 = vadd.f32 0.0, %v668
  %v670 = vpop.f32.mrb[0].mxu0
  %v671 = vadd.f32 0.0, %v670
  %672 = vmatprep.mubr.f32.mxu0 %v407
  %673 = vmatmul.mubr.f32.gmra.mrb[0].mxu0 %v406
  %v674 = vpop.f32.mrb[0].mxu0
  %v675 = vadd.f32 0.0, %v674
  %v676 = vpop.f32.mrb[0].mxu0
  %v677 = vadd.f32 0.0, %v676
  %678 = vmatprep.mubr.f32.mxu0 %v411
  %679 = vmatmul.mubr.f32.gmra.mrb[0].mxu0 %v410
  %v680 = vpop.f32.mrb[0].mxu0
  %v681 = vadd.f32 0.0, %v680
  %v682 = vpop.f32.mrb[0].mxu0
  %v683 = vadd.f32 0.0, %v682
  %684 = vmatprep.mubr.f32.mxu0 %v415
  %685 = vmatmul.mubr.f32.gmra.mrb[0].mxu0 %v414
  %v686 = vpop.f32.mrb[0].mxu0
  %v687 = vadd.f32 0.0, %v686
  %v688 = vpop.f32.mrb[0].mxu0
  %v689 = vadd.f32 0.0, %v688
  %690 = vmatprep.mubr.f32.mxu0 %v419
  %691 = vmatmul.mubr.f32.gmra.mrb[0].mxu0 %v418
  %v692 = vpop.f32.mrb[0].mxu0
  %v693 = vadd.f32 0.0, %v692
  %v694 = vpop.f32.mrb[0].mxu0
  %v695 = vadd.f32 0.0, %v694
  %696 = vmatprep.mubr.f32.mxu0 %v423
  %697 = vmatmul.mubr.f32.gmra.mrb[0].mxu0 %v422
  %v698 = vpop.f32.mrb[0].mxu0
  %v699 = vadd.f32 0.0, %v698
  %v700 = vpop.f32.mrb[0].mxu0
  %v701 = vadd.f32 0.0, %v700
  %702 = vmatprep.mubr.f32.mxu0 %v427
  %703 = vmatmul.mubr.f32.gmra.mrb[0].mxu0 %v426
  %v704 = vpop.f32.mrb[0].mxu0
  %v705 = vadd.f32 0.0, %v704
  %v706 = vpop.f32.mrb[0].mxu0
  %v707 = vadd.f32 0.0, %v706
  %708 = vmatprep.mubr.f32.mxu0 %v431
  %709 = vmatmul.mubr.f32.gmra.mrb[0].mxu0 %v430
  %v710 = vpop.f32.mrb[0].mxu0
  %v711 = vadd.f32 0.0, %v710
  %v712 = vpop.f32.mrb[0].mxu0
  %v713 = vadd.f32 0.0, %v712
  %714 = vmatprep.mubr.f32.mxu0 %v435
  %715 = vmatmul.mubr.f32.gmra.mrb[0].mxu0 %v434
  %v716 = vpop.f32.mrb[0].mxu0
  %v717 = vadd.f32 0.0, %v716
  %v718 = vpop.f32.mrb[0].mxu0
  %v719 = vadd.f32 0.0, %v718
  %720 = vmatprep.mubr.f32.mxu0 %v439
  %721 = vmatmul.mubr.f32.gmra.mrb[0].mxu0 %v438
  %v722 = vpop.f32.mrb[0].mxu0
  %v723 = vadd.f32 0.0, %v722
  %v724 = vpop.f32.mrb[0].mxu0
  %v725 = vadd.f32 0.0, %v724
  %726 = vmatprep.mubr.f32.mxu0 %v443
  %727 = vmatmul.mubr.f32.gmra.mrb[0].mxu0 %v442
  %v728 = vpop.f32.mrb[0].mxu0
  %v729 = vadd.f32 0.0, %v728
  %v730 = vpop.f32.mrb[0].mxu0
  %v731 = vadd.f32 0.0, %v730
  %732 = vmatprep.mubr.f32.mxu0 %v447
  %733 = vmatmul.mubr.f32.gmra.mrb[0].mxu0 %v446
  %v734 = vpop.f32.mrb[0].mxu0
  %v735 = vadd.f32 0.0, %v734
  %v736 = vpop.f32.mrb[0].mxu0
  %v737 = vadd.f32 0.0, %v736
  %738 = vdwg.mxu0
  %739 = vmatprep.subr.mxu0 %v515
  %740 = vmatpush1.msra.mxu0 %v514
  %741 = vmatprep.subr.mxu0 %v517
  %742 = vmatpush1.msra.mxu0 %v516
  %743 = vmatprep.subr.mxu0 %v519
  %744 = vmatpush1.msra.mxu0 %v518
  %745 = vmatprep.subr.mxu0 %v521
  %746 = vmatpush1.msra.mxu0 %v520
  %747 = vmatprep.subr.mxu0 %v523
  %748 = vmatpush1.msra.mxu0 %v522
  %749 = vmatprep.subr.mxu0 %v525
  %750 = vmatpush1.msra.mxu0 %v524
  %751 = vmatprep.subr.mxu0 %v527
  %752 = vmatpush1.msra.mxu0 %v526
  %753 = vmatprep.subr.mxu0 %v529
  %754 = vmatpush1.msra.mxu0 %v528
  %755 = vmatprep.subr.mxu0 %v531
  %756 = vmatpush1.msra.mxu0 %v530
  %757 = vmatprep.subr.mxu0 %v533
  %758 = vmatpush1.msra.mxu0 %v532
  %759 = vmatprep.subr.mxu0 %v535
  %760 = vmatpush1.msra.mxu0 %v534
  %761 = vmatprep.subr.mxu0 %v537
  %762 = vmatpush1.msra.mxu0 %v536
  %763 = vmatprep.subr.mxu0 %v539
  %764 = vmatpush1.msra.mxu0 %v538
  %765 = vmatprep.subr.mxu0 %v541
  %766 = vmatpush1.msra.mxu0 %v540
  %767 = vmatprep.subr.mxu0 %v543
  %768 = vmatpush1.msra.mxu0 %v542
  %769 = vmatprep.subr.mxu0 %v545
  %770 = vmatpush1.msra.mxu0 %v544
  %771 = vmatprep.subr.mxu0 %v547
  %772 = vmatpush1.msra.mxu0 %v546
  %773 = vmatprep.subr.mxu0 %v549
  %774 = vmatpush1.msra.mxu0 %v548
  %775 = vmatprep.subr.mxu0 %v551
  %776 = vmatpush1.msra.mxu0 %v550
  %777 = vmatprep.subr.mxu0 %v553
  %778 = vmatpush1.msra.mxu0 %v552
  %779 = vmatprep.subr.mxu0 %v555
  %780 = vmatpush1.msra.mxu0 %v554
  %781 = vmatprep.subr.mxu0 %v557
  %782 = vmatpush1.msra.mxu0 %v556
  %783 = vmatprep.subr.mxu0 %v559
  %784 = vmatpush1.msra.mxu0 %v558
  %785 = vmatprep.subr.mxu0 %v561
  %786 = vmatpush1.msra.mxu0 %v560
  %787 = vmatprep.subr.mxu0 %v563
  %788 = vmatpush1.msra.mxu0 %v562
  %789 = vmatprep.subr.mxu0 %v565
  %790 = vmatpush1.msra.mxu0 %v564
  %791 = vmatprep.subr.mxu0 %v567
  %792 = vmatpush1.msra.mxu0 %v566
  %793 = vmatprep.subr.mxu0 %v569
  %794 = vmatpush1.msra.mxu0 %v568
  %795 = vmatprep.subr.mxu0 %v571
  %796 = vmatpush1.msra.mxu0 %v570
  %797 = vmatprep.subr.mxu0 %v573
  %798 = vmatpush1.msra.mxu0 %v572
  %799 = vmatprep.subr.mxu0 %v575
  %800 = vmatpush1.msra.mxu0 %v574
  %801 = vmatprep.subr.mxu0 %v577
  %802 = vmatpush1.msra.mxu0 %v576
  %803 = vmatprep.mubr.f32.mxu0 %v389
  %804 = vmatmul.mubr.f32.gmra.mrb[0].mxu0 %v388
  %v805 = vpop.f32.mrb[0].mxu0
  %v806 = vadd.f32 %v645, %v805
  %v807 = vpop.f32.mrb[0].mxu0
  %v808 = vadd.f32 %v647, %v807
  %809 = vmatprep.mubr.f32.mxu0 %v393
  %810 = vmatmul.mubr.f32.gmra.mrb[0].mxu0 %v392
  %v811 = vpop.f32.mrb[0].mxu0
  %v812 = vadd.f32 %v651, %v811
  %v813 = vpop.f32.mrb[0].mxu0
  %v814 = vadd.f32 %v653, %v813
  %815 = vmatprep.mubr.f32.mxu0 %v397
  %816 = vmatmul.mubr.f32.gmra.mrb[0].mxu0 %v396
  %v817 = vpop.f32.mrb[0].mxu0
  %v818 = vadd.f32 %v657, %v817
  %v819 = vpop.f32.mrb[0].mxu0
  %v820 = vadd.f32 %v659, %v819
  %821 = vmatprep.mubr.f32.mxu0 %v401
  %822 = vmatmul.mubr.f32.gmra.mrb[0].mxu0 %v400
  %v823 = vpop.f32.mrb[0].mxu0
  %v824 = vadd.f32 %v663, %v823
  %v825 = vpop.f32.mrb[0].mxu0
  %v826 = vadd.f32 %v665, %v825
  %827 = vmatprep.mubr.f32.mxu0 %v405
  %828 = vmatmul.mubr.f32.gmra.mrb[0].mxu0 %v404
  %v829 = vpop.f32.mrb[0].mxu0
  %v830 = vadd.f32 %v669, %v829
  %v831 = vpop.f32.mrb[0].mxu0
  %v832 = vadd.f32 %v671, %v831
  %833 = vmatprep.mubr.f32.mxu0 %v409
  %834 = vmatmul.mubr.f32.gmra.mrb[0].mxu0 %v408
  %v835 = vpop.f32.mrb[0].mxu0
  %v836 = vadd.f32 %v675, %v835
  %v837 = vpop.f32.mrb[0].mxu0
  %v838 = vadd.f32 %v677, %v837
  %839 = vmatprep.mubr.f32.mxu0 %v413
  %840 = vmatmul.mubr.f32.gmra.mrb[0].mxu0 %v412
  %v841 = vpop.f32.mrb[0].mxu0
  %v842 = vadd.f32 %v681, %v841
  %v843 = vpop.f32.mrb[0].mxu0
  %v844 = vadd.f32 %v683, %v843
  %845 = vmatprep.mubr.f32.mxu0 %v417
  %846 = vmatmul.mubr.f32.gmra.mrb[0].mxu0 %v416
  %v847 = vpop.f32.mrb[0].mxu0
  %v848 = vadd.f32 %v687, %v847
  %v849 = vpop.f32.mrb[0].mxu0
  %v850 = vadd.f32 %v689, %v849
  %851 = vmatprep.mubr.f32.mxu0 %v421
  %852 = vmatmul.mubr.f32.gmra.mrb[0].mxu0 %v420
  %v853 = vpop.f32.mrb[0].mxu0
  %v854 = vadd.f32 %v693, %v853
  %v855 = vpop.f32.mrb[0].mxu0
  %v856 = vadd.f32 %v695, %v855
  %857 = vmatprep.mubr.f32.mxu0 %v425
  %858 = vmatmul.mubr.f32.gmra.mrb[0].mxu0 %v424
  %v859 = vpop.f32.mrb[0].mxu0
  %v860 = vadd.f32 %v699, %v859
  %v861 = vpop.f32.mrb[0].mxu0
  %v862 = vadd.f32 %v701, %v861
  %863 = vmatprep.mubr.f32.mxu0 %v429
  %864 = vmatmul.mubr.f32.gmra.mrb[0].mxu0 %v428
  %v865 = vpop.f32.mrb[0].mxu0
  %v866 = vadd.f32 %v705, %v865
  %v867 = vpop.f32.mrb[0].mxu0
  %v868 = vadd.f32 %v707, %v867
  %869 = vmatprep.mubr.f32.mxu0 %v433
  %870 = vmatmul.mubr.f32.gmra.mrb[0].mxu0 %v432
  %v871 = vpop.f32.mrb[0].mxu0
  %v872 = vadd.f32 %v711, %v871
  %v873 = vpop.f32.mrb[0].mxu0
  %v874 = vadd.f32 %v713, %v873
  %875 = vmatprep.mubr.f32.mxu0 %v437
  %876 = vmatmul.mubr.f32.gmra.mrb[0].mxu0 %v436
  %v877 = vpop.f32.mrb[0].mxu0
  %v878 = vadd.f32 %v717, %v877
  %v879 = vpop.f32.mrb[0].mxu0
  %v880 = vadd.f32 %v719, %v879
  %881 = vmatprep.mubr.f32.mxu0 %v441
  %882 = vmatmul.mubr.f32.gmra.mrb[0].mxu0 %v440
  %v883 = vpop.f32.mrb[0].mxu0
  %v884 = vadd.f32 %v723, %v883
  %v885 = vpop.f32.mrb[0].mxu0
  %v886 = vadd.f32 %v725, %v885
  %887 = vmatprep.mubr.f32.mxu0 %v445
  %888 = vmatmul.mubr.f32.gmra.mrb[0].mxu0 %v444
  %v889 = vpop.f32.mrb[0].mxu0
  %v890 = vadd.f32 %v729, %v889
  %v891 = vpop.f32.mrb[0].mxu0
  %v892 = vadd.f32 %v731, %v891
  %893 = vmatprep.mubr.f32.mxu0 %v449
  %894 = vmatmul.mubr.f32.gmra.mrb[0].mxu0 %v448
  %v895 = vpop.f32.mrb[0].mxu0
  %v896 = vadd.f32 %v735, %v895
  %v897 = vpop.f32.mrb[0].mxu0
  %v898 = vadd.f32 %v737, %v897
  %899 = vdwg.mxu0
  %900 = vst [vmem:[%s5] sm:$0xff] %v806
  %901 = vst [vmem:[%s5 + $0x8] sm:$0xff] %v808
  %902 = vst [vmem:[%s5 + $0x10] sm:$0xff] %v812
  %903 = vst [vmem:[%s5 + $0x18] sm:$0xff] %v814
  %904 = vst [vmem:[%s5 + $0x20] sm:$0xff] %v818
  %905 = vst [vmem:[%s5 + $0x28] sm:$0xff] %v820
  %906 = vst [vmem:[%s5 + $0x30] sm:$0xff] %v824
  %907 = vst [vmem:[%s5 + $0x38] sm:$0xff] %v826
  %908 = vst [vmem:[%s5 + $0x40] sm:$0xff] %v830
  %909 = vst [vmem:[%s5 + $0x48] sm:$0xff] %v832
  %910 = vst [vmem:[%s5 + $0x50] sm:$0xff] %v836
  %911 = vst [vmem:[%s5 + $0x58] sm:$0xff] %v838
  %912 = vst [vmem:[%s5 + $0x60] sm:$0xff] %v842
  %913 = vst [vmem:[%s5 + $0x68] sm:$0xff] %v844
  %914 = vst [vmem:[%s5 + $0x70] sm:$0xff] %v848
  %915 = vst [vmem:[%s5 + $0x78] sm:$0xff] %v850
  %916 = vst [vmem:[%s5 + $0x80] sm:$0xff] %v854
  %917 = vst [vmem:[%s5 + $0x88] sm:$0xff] %v856
  %918 = vst [vmem:[%s5 + $0x90] sm:$0xff] %v860
  %919 = vst [vmem:[%s5 + $0x98] sm:$0xff] %v862
  %920 = vst [vmem:[%s5 + $0xa0] sm:$0xff] %v866
  %921 = vst [vmem:[%s5 + $0xa8] sm:$0xff] %v868
  %922 = vst [vmem:[%s5 + $0xb0] sm:$0xff] %v872
  %923 = vst [vmem:[%s5 + $0xb8] sm:$0xff] %v874
  %924 = vst [vmem:[%s5 + $0xc0] sm:$0xff] %v878
  %925 = vst [vmem:[%s5 + $0xc8] sm:$0xff] %v880
  %926 = vst [vmem:[%s5 + $0xd0] sm:$0xff] %v884
  %927 = vst [vmem:[%s5 + $0xd8] sm:$0xff] %v886
  %928 = vst [vmem:[%s5 + $0xe0] sm:$0xff] %v890
  %929 = vst [vmem:[%s5 + $0xe8] sm:$0xff] %v892
  %930 = vst [vmem:[%s5 + $0xf0] sm:$0xff] %v896
  %931 = vst [vmem:[%s5 + $0xf8] sm:$0xff] %v898
  %v932 = vadd.f32 %v806, %v812
  %v933 = vadd.f32 %v932, %v818
  %v934 = vadd.f32 %v933, %v824
  %v935 = vadd.f32 %v934, %v830
  %v936 = vadd.f32 %v935, %v836
  %v937 = vadd.f32 %v936, %v842
  %v938 = vadd.f32 %v937, %v848
  %v939 = vadd.f32 %v938, %v854
  %v940 = vadd.f32 %v939, %v860
  %v941 = vadd.f32 %v940, %v866
  %v942 = vadd.f32 %v941, %v872
  %v943 = vadd.f32 %v942, %v878
  %v944 = vadd.f32 %v943, %v884
  %v945 = vadd.f32 %v944, %v890
  %v946 = vadd.f32 %v945, %v896
  %v947 = vrot.slane %v946, 4
  %v948 = vadd.f32 %v946, %v947
  %v949 = vrot.slane %v948, 2
  %v950 = vadd.f32 %v948, %v949
  %v951 = vrot.slane %v950, 1
  %v952 = vadd.f32 %v950, %v951
  %v953 = vadd.f32 %v808, %v814
  %v954 = vadd.f32 %v953, %v820
  %v955 = vadd.f32 %v954, %v826
  %v956 = vadd.f32 %v955, %v832
  %v957 = vadd.f32 %v956, %v838
  %v958 = vadd.f32 %v957, %v844
  %v959 = vadd.f32 %v958, %v850
  %v960 = vadd.f32 %v959, %v856
  %v961 = vadd.f32 %v960, %v862
  %v962 = vadd.f32 %v961, %v868
  %v963 = vadd.f32 %v962, %v874
  %v964 = vadd.f32 %v963, %v880
  %v965 = vadd.f32 %v964, %v886
  %v966 = vadd.f32 %v965, %v892
  %v967 = vadd.f32 %v966, %v898
  %v968 = vrot.slane %v967, 4
  %v969 = vadd.f32 %v967, %v968
  %v970 = vrot.slane %v969, 2
  %v971 = vadd.f32 %v969, %v970
  %v972 = vrot.slane %v971, 1
  %v973 = vadd.f32 %v971, %v972
  %v974 = vmul.f32 %v806, %v806
  %v975 = vmul.f32 %v808, %v808
  %v976 = vmul.f32 %v812, %v812
  %v977 = vmul.f32 %v814, %v814
  %v978 = vmul.f32 %v818, %v818
  %v979 = vmul.f32 %v820, %v820
  %v980 = vmul.f32 %v824, %v824
  %v981 = vmul.f32 %v826, %v826
  %v982 = vmul.f32 %v830, %v830
  %v983 = vmul.f32 %v832, %v832
  %v984 = vmul.f32 %v836, %v836
  %v985 = vmul.f32 %v838, %v838
  %v986 = vmul.f32 %v842, %v842
  %v987 = vmul.f32 %v844, %v844
  %v988 = vmul.f32 %v848, %v848
  %v989 = vmul.f32 %v850, %v850
  %v990 = vmul.f32 %v854, %v854
  %v991 = vmul.f32 %v856, %v856
  %v992 = vmul.f32 %v860, %v860
  %v993 = vmul.f32 %v862, %v862
  %v994 = vmul.f32 %v866, %v866
  %v995 = vmul.f32 %v868, %v868
  %v996 = vmul.f32 %v872, %v872
  %v997 = vmul.f32 %v874, %v874
  %v998 = vmul.f32 %v878, %v878
  %v999 = vmul.f32 %v880, %v880
  %v1000 = vmul.f32 %v884, %v884
  %v1001 = vmul.f32 %v886, %v886
  %v1002 = vmul.f32 %v890, %v890
  %v1003 = vmul.f32 %v892, %v892
  %v1004 = vmul.f32 %v896, %v896
  %v1005 = vmul.f32 %v898, %v898
  %v1006 = vadd.f32 %v974, %v976
  %v1007 = vadd.f32 %v1006, %v978
  %v1008 = vadd.f32 %v1007, %v980
  %v1009 = vadd.f32 %v1008, %v982
  %v1010 = vadd.f32 %v1009, %v984
  %v1011 = vadd.f32 %v1010, %v986
  %v1012 = vadd.f32 %v1011, %v988
  %v1013 = vadd.f32 %v1012, %v990
  %v1014 = vadd.f32 %v1013, %v992
  %v1015 = vadd.f32 %v1014, %v994
  %v1016 = vadd.f32 %v1015, %v996
  %v1017 = vadd.f32 %v1016, %v998
  %v1018 = vadd.f32 %v1017, %v1000
  %v1019 = vadd.f32 %v1018, %v1002
  %v1020 = vadd.f32 %v1019, %v1004
  %v1021 = vrot.slane %v1020, 4
  %v1022 = vadd.f32 %v1020, %v1021
  %v1023 = vrot.slane %v1022, 2
  %v1024 = vadd.f32 %v1022, %v1023
  %v1025 = vrot.slane %v1024, 1
  %v1026 = vadd.f32 %v1024, %v1025
  %v1027 = vadd.f32 %v975, %v977
  %v1028 = vadd.f32 %v1027, %v979
  %v1029 = vadd.f32 %v1028, %v981
  %v1030 = vadd.f32 %v1029, %v983
  %v1031 = vadd.f32 %v1030, %v985
  %v1032 = vadd.f32 %v1031, %v987
  %v1033 = vadd.f32 %v1032, %v989
  %v1034 = vadd.f32 %v1033, %v991
  %v1035 = vadd.f32 %v1034, %v993
  %v1036 = vadd.f32 %v1035, %v995
  %v1037 = vadd.f32 %v1036, %v997
  %v1038 = vadd.f32 %v1037, %v999
  %v1039 = vadd.f32 %v1038, %v1001
  %v1040 = vadd.f32 %v1039, %v1003
  %v1041 = vadd.f32 %v1040, %v1005
  %v1042 = vrot.slane %v1041, 4
  %v1043 = vadd.f32 %v1041, %v1042
  %v1044 = vrot.slane %v1043, 2
  %v1045 = vadd.f32 %v1043, %v1044
  %v1046 = vrot.slane %v1045, 1
  %v1047 = vadd.f32 %v1045, %v1046
  %vm1048 = vcmask 1040384
  %v1049 = vsel %vm1048, %v952, %v1026
  %v1050 = vsel %vm1048, %v973, %v1047
  %v1053 = vcombine.low %v1049, %v1050
  %v1055 = vunpack.c.l.s4 1983009808
  %v1056 = vunpack.c.0.s8 %v1055
  %v1057 = vlaneseq
  %v1058 = vshrl.u32 %v1057, 7
  %v1059 = vsub.s32 %v1056, %v1058
  %v1060 = vrot.slane %v1053, %v1059
  %1062 = vst [vmem:[%s6] sm:$0xf] %v1060
  // Predicated region
  $region22: #{forward.4} parent=0 // pred_check
    _
  $region23: #{forward.4} parent=0 // pred_check_branch
    %1064 = sbr.rel (0) target = $region25
  $region24: #{forward.4} parent=0 // pred_region
    _
  $region25: #{forward.4} parent=0 // pred_fallthru
    _
  // Predicated region
  $region26: #{forward.4} parent=0 // pred_check
    _
  $region27: #{forward.4} parent=0 // pred_check_branch
    %1066 = sbr.rel (0) target = $region29
  $region28: #{forward.4} parent=0 // pred_region
    _
  $region29: #{forward.4} parent=0 // pred_fallthru
    _
  // Predicated region
  $region30: #{forward.4} parent=0 // pred_check
    _
  $region31: #{forward.4} parent=0 // pred_check_branch
    %1068 = sbr.rel (0) target = $region33
  $region32: #{forward.4} parent=0 // pred_region
    _
  $region33: #{forward.4} parent=0 // pred_fallthru
    _
  // Predicated region
  $region34: #{forward.4} parent=0 // pred_check
    _
  $region35: #{forward.4} parent=0 // pred_check_branch
    %1070 = sbr.rel (0) target = $region37
  $region36: #{forward.4} parent=0 // pred_region
    _
  $region37: #{forward.4} parent=0 // pred_fallthru
    _

</llo_original>
